<compile_context>
chip_gen: v7x
topology: tpu7x:2x2x1
jax: 0.10.0
libtpu: 0.0.40
codegen_flags: <defaults>
</compile_context>

<pallas_src>
import functools
import math

import jax
import jax.numpy as jnp
from jax.experimental import pallas as pl
from jax.experimental.pallas import tpu as pltpu

# ---------------- small synthetic RoBERTa-like config ----------------
VOCAB = 100
PAD_ID = 1
D_MODEL = 64
NUM_HEADS = 4
HEAD_DIM = D_MODEL // NUM_HEADS
INTERMEDIATE = 128
NUM_LAYERS = 2
MAX_POS = 40
LORA_RANK = 8
NUM_CLASSES = 2          # task_type = 'glue'
LN_EPS = 1e-5
BATCH = 2
SEQ = 8

MXU_DTYPE = jnp.bfloat16  # MXU operand dtype (f32 accumulation inside kernels)


# ---------------- in-kernel helpers (f32 elementwise math) ----------------
def _ln(x, g, b, eps):
    mean = jnp.mean(x, axis=-1, keepdims=True)
    var = jnp.mean((x - mean) ** 2, axis=-1, keepdims=True)
    return (x - mean) * jax.lax.rsqrt(var + eps) * g + b


def _gelu_erf(x):
    # exact (erf) GELU, matching HF hidden_act="gelu"
    return 0.5 * x * (1.0 + jax.lax.erf(x * (1.0 / math.sqrt(2.0))))


# ---------------- fused encoder-layer kernel ----------------
def _encoder_layer_kernel(h_ref, mask_ref,
                          wqkv_ref, bqkv_ref, acat_ref, bcat_ref,
                          aow_ref, aob_ref, alng_ref, alnb_ref,
                          iw_ref, ib_ref, ow_ref, ob_ref, olng_ref, olnb_ref,
                          out_ref, *, num_heads, head_dim, eps):
    d = num_heads * head_dim
    x = h_ref[0].astype(jnp.float32)                    # (S, D)
    xb = x.astype(MXU_DTYPE)

    # Fused Q/K/V projection (value uses query weights/bias: original module's bug).
    qkv = jnp.dot(xb, wqkv_ref[...],
                  preferred_element_type=jnp.float32) + bqkv_ref[...]        # (S, 3D)
    # LoRA deltas via low-rank two-matmul form: (x @ A_cat^T) @ B_cat^T.
    xa = jnp.dot(xb, acat_ref[...], preferred_element_type=jnp.float32)      # (S, 2r)
    lora_qv = jnp.dot(xa.astype(MXU_DTYPE), bcat_ref[...],
                      preferred_element_type=jnp.float32)                    # (S, 2D)

    q = qkv[:, :d] + lora_qv[:, :d]
    k = qkv[:, d:2 * d]
    v = qkv[:, 2 * d:] + lora_qv[:, d:]

    bias = mask_ref[0]                                  # (1, S) additive mask bias
    scale = 1.0 / math.sqrt(head_dim)

    # All heads handled in this single grid step (static unrolled loop, H small).
    ctx_parts = []
    for hi in range(num_heads):
        lo = hi * head_dim
        qh = q[:, lo:lo + head_dim].astype(MXU_DTYPE)
        kh = k[:, lo:lo + head_dim].astype(MXU_DTYPE)
        vh = v[:, lo:lo + head_dim].astype(MXU_DTYPE)
        # scores[i, j] = q_i . k_j (no in-kernel transpose: contract dim 1 of both)
        s = jax.lax.dot_general(qh, kh, (((1,), (1,)), ((), ())),
                                preferred_element_type=jnp.float32) * scale
        s = s + bias                                    # broadcast over query rows
        m = jnp.max(s, axis=-1, keepdims=True)
        p = jnp.exp(s - m)
        denom = jnp.sum(p, axis=-1, keepdims=True)
        probs = p * pl.reciprocal(denom, approx=True)   # EUP reciprocal, VPU-free
        # TODO(synk): attention-probs dropout is inference-mode identity here.
        ctx_parts.append(jnp.dot(probs.astype(MXU_DTYPE), vh,
                                 preferred_element_type=jnp.float32))
    ctx = jnp.concatenate(ctx_parts, axis=-1)           # (S, D)

    # RobertaSelfOutput: dense -> (dropout=identity) -> LayerNorm(residual)
    attn_out = jnp.dot(ctx.astype(MXU_DTYPE), aow_ref[...],
                       preferred_element_type=jnp.float32) + aob_ref[...]
    h1 = _ln(attn_out + x, alng_ref[...], alnb_ref[...], eps)

    # Intermediate (gelu-erf) + Output with residual LayerNorm
    inter = jnp.dot(h1.astype(MXU_DTYPE), iw_ref[...],
                    preferred_element_type=jnp.float32) + ib_ref[...]
    inter = _gelu_erf(inter)
    ffn = jnp.dot(inter.astype(MXU_DTYPE), ow_ref[...],
                  preferred_element_type=jnp.float32) + ob_ref[...]
    h2 = _ln(ffn + h1, olng_ref[...], olnb_ref[...], eps)

    out_ref[0] = h2.astype(out_ref.dtype)


def pallas_encoder_layer(h, mask_bias, pk, *, num_heads, head_dim, eps=LN_EPS):
    b, s, d = h.shape

    def wspec(arr):
        nd = arr.ndim
        return pl.BlockSpec(arr.shape, lambda i, nd=nd: (0,) * nd)

    weights = [pk["wqkv_t"], pk["bqkv"], pk["a_cat_t"], pk["b_cat_t"],
               pk["ao_w_t"], pk["ao_b"], pk["a_ln_g"], pk["a_ln_b"],
               pk["i_w_t"], pk["i_b"], pk["o_w_t"], pk["o_b"],
               pk["o_ln_g"], pk["o_ln_b"]]

    return pl.pallas_call(
        functools.partial(_encoder_layer_kernel,
                          num_heads=num_heads, head_dim=head_dim, eps=eps),
        out_shape=jax.ShapeDtypeStruct((b, s, d), h.dtype),
        grid=(b,),
        in_specs=[pl.BlockSpec((1, s, d), lambda i: (i, 0, 0)),
                  pl.BlockSpec((1, 1, s), lambda i: (i, 0, 0))]
                 + [wspec(w) for w in weights],
        out_specs=pl.BlockSpec((1, s, d), lambda i: (i, 0, 0)),
        compiler_params=pltpu.CompilerParams(
            dimension_semantics=("parallel",)),   # v7x: shard batch across 2 TCs
    )(h, mask_bias, *weights)


# ---------------- embedding LayerNorm kernel ----------------
def _layernorm_kernel(x_ref, g_ref, b_ref, o_ref, *, eps):
    y = _ln(x_ref[...].astype(jnp.float32), g_ref[...], b_ref[...], eps)
    o_ref[...] = y.astype(o_ref.dtype)


def pallas_layernorm(x, gamma, beta, eps=LN_EPS):
    n, d = x.shape
    return pl.pallas_call(
        functools.partial(_layernorm_kernel, eps=eps),
        out_shape=jax.ShapeDtypeStruct((n, d), x.dtype),
        grid=(1,),
        in_specs=[pl.BlockSpec((n, d), lambda i: (0, 0)),
                  pl.BlockSpec((1, d), lambda i: (0, 0)),
                  pl.BlockSpec((1, d), lambda i: (0, 0))],
        out_specs=pl.BlockSpec((n, d), lambda i: (0, 0)),
    )(x, gamma, beta)


# ---------------- fused GLUE head kernel (LayerNorm + classifier) ----------------
def _glue_head_kernel(cls_ref, g_ref, b_ref, w_ref, cb_ref, o_ref, *, eps):
    y = _ln(cls_ref[...].astype(jnp.float32), g_ref[...], b_ref[...], eps)
    # TODO(synk): finetune_head_dropout is inference-mode identity.
    logits = jnp.dot(y.astype(MXU_DTYPE), w_ref[...],
                     preferred_element_type=jnp.float32) + cb_ref[...]
    o_ref[...] = logits.astype(o_ref.dtype)


def pallas_glue_head(cls, gamma, beta, cls_w_t, cls_b, eps=LN_EPS):
    b, d = cls.shape
    nc = cls_w_t.shape[1]
    return pl.pallas_call(
        functools.partial(_glue_head_kernel, eps=eps),
        out_shape=jax.ShapeDtypeStruct((b, nc), jnp.float32),
        grid=(1,),
        in_specs=[pl.BlockSpec((b, d), lambda i: (0, 0)),
                  pl.BlockSpec((1, d), lambda i: (0, 0)),
                  pl.BlockSpec((1, d), lambda i: (0, 0)),
                  pl.BlockSpec((d, nc), lambda i: (0, 0)),
                  pl.BlockSpec((1, nc), lambda i: (0, 0))],
        out_specs=pl.BlockSpec((b, nc), lambda i: (0, 0)),
    )(cls, gamma, beta, cls_w_t, cls_b)


# ---------------- parameter init (deterministic, synthetic) ----------------
def init_params(key):
    keys = iter(jax.random.split(key, 8 + 16 * NUM_LAYERS))

    def normal(shape, std=0.02):
        return jax.random.normal(next(keys), shape, jnp.float32) * std

    params = {
        "word_emb": normal((VOCAB, D_MODEL)),
        "pos_emb": normal((MAX_POS, D_MODEL)),
        "tok_emb": normal((1, D_MODEL)),
        "emb_ln_g": jnp.ones((1, D_MODEL), jnp.float32),
        "emb_ln_b": jnp.zeros((1, D_MODEL), jnp.float32),
        "head_ln_g": jnp.ones((1, D_MODEL), jnp.float32),
        "head_ln_b": jnp.zeros((1, D_MODEL), jnp.float32),
        "cls_w": normal((NUM_CLASSES, D_MODEL)),
        "cls_b": jnp.zeros((NUM_CLASSES,), jnp.float32),
        "layers": [],
    }
    for _ in range(NUM_LAYERS):
        layer = {
            "q_w": normal((D_MODEL, D_MODEL)), "q_b": jnp.zeros((D_MODEL,), jnp.float32),
            "k_w": normal((D_MODEL, D_MODEL)), "k_b": jnp.zeros((D_MODEL,), jnp.float32),
            "v_w": normal((D_MODEL, D_MODEL)), "v_b": jnp.zeros((D_MODEL,), jnp.float32),
            # LoRA init exactly as in LoraRobertaSelfAttention.__init__
            "lora_q_B": jnp.zeros((D_MODEL, LORA_RANK), jnp.float32),
            "lora_q_A": jax.random.normal(next(keys), (LORA_RANK, D_MODEL), jnp.float32),
            "lora_v_B": jnp.zeros((D_MODEL, LORA_RANK), jnp.float32),
            "lora_v_A": jax.random.normal(next(keys), (LORA_RANK, D_MODEL), jnp.float32),
            "ao_w": normal((D_MODEL, D_MODEL)), "ao_b": jnp.zeros((D_MODEL,), jnp.float32),
            "a_ln_g": jnp.ones((1, D_MODEL), jnp.float32),
            "a_ln_b": jnp.zeros((1, D_MODEL), jnp.float32),
            "i_w": normal((INTERMEDIATE, D_MODEL)), "i_b": jnp.zeros((INTERMEDIATE,), jnp.float32),
            "o_w": normal((D_MODEL, INTERMEDIATE)), "o_b": jnp.zeros((D_MODEL,), jnp.float32),
            "o_ln_g": jnp.ones((1, D_MODEL), jnp.float32),
            "o_ln_b": jnp.zeros((1, D_MODEL), jnp.float32),
        }
        params["layers"].append(layer)
    return params


# ---------------- one-time weight packing (layout plumbing, done outside the kernels) ----
def pack_params(params):
    d, r = D_MODEL, LORA_RANK
    packed = {
        "word_emb": params["word_emb"],
        "pos_emb": params["pos_emb"],
        "tok_emb": params["tok_emb"],
        "emb_ln_g": params["emb_ln_g"], "emb_ln_b": params["emb_ln_b"],
        "head_ln_g": params["head_ln_g"], "head_ln_b": params["head_ln_b"],
        "cls_w_t": params["cls_w"].T.astype(MXU_DTYPE),
        "cls_b": params["cls_b"].reshape(1, -1),
        "layers": [],
    }
    for p in params["layers"]:
        # Block-diagonal B_cat^T so one matmul yields [lora_q_delta | lora_v_delta].
        b_cat_t = jnp.zeros((2 * r, 2 * d), jnp.float32)
        b_cat_t = b_cat_t.at[:r, :d].set(p["lora_q_B"].T)
        b_cat_t = b_cat_t.at[r:, d:].set(p["lora_v_B"].T)
        packed["layers"].append({
            # NOTE: value projection intentionally reuses q_w/q_b combined with the
            # *value* LoRA matrices (reproduces the original module's lora_value bug).
            "wqkv_t": jnp.concatenate([p["q_w"].T, p["k_w"].T, p["q_w"].T],
                                      axis=1).astype(MXU_DTYPE),          # (D, 3D)
            "bqkv": jnp.concatenate([p["q_b"], p["k_b"], p["q_b"]]).reshape(1, -1),
            "a_cat_t": jnp.concatenate([p["lora_q_A"].T, p["lora_v_A"].T],
                                       axis=1).astype(MXU_DTYPE),         # (D, 2r)
            "b_cat_t": b_cat_t.astype(MXU_DTYPE),                         # (2r, 2D)
            "ao_w_t": p["ao_w"].T.astype(MXU_DTYPE), "ao_b": p["ao_b"].reshape(1, -1),
            "a_ln_g": p["a_ln_g"], "a_ln_b": p["a_ln_b"],
            "i_w_t": p["i_w"].T.astype(MXU_DTYPE), "i_b": p["i_b"].reshape(1, -1),
            "o_w_t": p["o_w"].T.astype(MXU_DTYPE), "o_b": p["o_b"].reshape(1, -1),
            "o_ln_g": p["o_ln_g"], "o_ln_b": p["o_ln_b"],
        })
    return packed


# ---------------- model forward ----------------
def forward_glue(packed, input_ids, attention_mask):
    batch, seq = input_ids.shape

    # RoBERTa embeddings (gathers in plain JAX glue; LayerNorm in Pallas)
    mask_ne = (input_ids != PAD_ID).astype(jnp.int32)
    position_ids = jnp.cumsum(mask_ne, axis=1) * mask_ne + PAD_ID
    h = (jnp.take(packed["word_emb"], input_ids, axis=0)
         + jnp.take(packed["pos_emb"], position_ids, axis=0)
         + packed["tok_emb"][0])
    h = pallas_layernorm(h.reshape(batch * seq, D_MODEL),
                         packed["emb_ln_g"], packed["emb_ln_b"])
    h = h.reshape(batch, seq, D_MODEL)
    # TODO(synk): embedding dropout is inference-mode identity.

    # extended attention mask bias: (1 - mask) * finfo(float32).min, shape (B, 1, S)
    mask_bias = ((1.0 - attention_mask.astype(jnp.float32))
                 * jnp.finfo(jnp.float32).min).reshape(batch, 1, seq)

    for pk in packed["layers"]:
        h = pallas_encoder_layer(h, mask_bias, pk,
                                 num_heads=NUM_HEADS, head_dim=HEAD_DIM)

    # GLUE head: CLS token -> LayerNorm -> dropout(identity) -> Linear
    cls = h[:, 0, :]
    logits = pallas_glue_head(cls, packed["head_ln_g"], packed["head_ln_b"],
                              packed["cls_w_t"], packed["cls_b"])
    if NUM_CLASSES == 1:
        logits = jax.nn.sigmoid(logits) * 5.0
    # TODO(synk): squad / squad_v2 heads reuse the same fused LayerNorm+Linear kernel
    # over all tokens instead of only the CLS token.
    return logits


if __name__ == "__main__":
    key = jax.random.PRNGKey(0)
    pkey, ikey = jax.random.split(key)
    params = init_params(pkey)
    packed = pack_params(params)   # pre-transpose / fuse weights once, outside the kernels

    input_ids = jax.random.randint(ikey, (BATCH, SEQ), 2, VOCAB, dtype=jnp.int32)
    attention_mask = jnp.ones((BATCH, SEQ), dtype=jnp.int32)

    fwd = jax.jit(forward_glue)
    logits = fwd(packed, input_ids, attention_mask)
    jax.block_until_ready(logits)
    assert logits.shape == (BATCH, NUM_CLASSES)
    assert bool(jnp.all(jnp.isfinite(logits)))
    print("KERNEL_OK")
</pallas_src>

<mosaic_0001>
module attributes {stable_mosaic.version = 11 : i64} {
  func.func @_layernorm_kernel(%arg0: i32, %arg1: memref<16x64xf32, #tpu.memory_space<vmem>>, %arg2: memref<1x64xf32, #tpu.memory_space<vmem>>, %arg3: memref<1x64xf32, #tpu.memory_space<vmem>>, %arg4: memref<16x64xf32, #tpu.memory_space<vmem>>) attributes {dimension_semantics = [#tpu.dimension_semantics<arbitrary>], iteration_bounds = array<i64: 1>, scalar_prefetch = 0 : i64, scratch_operands = 0 : i64, tpu.core_type = #tpu.core_type<tc>, window_params = [{pipeline_mode = #tpu.pipeline_mode<synchronous>, transform_indices = @transform_0, window_bounds = array<i64: 16, 64>}, {pipeline_mode = #tpu.pipeline_mode<synchronous>, transform_indices = @transform_1, window_bounds = array<i64: 1, 64>}, {pipeline_mode = #tpu.pipeline_mode<synchronous>, transform_indices = @transform_2, window_bounds = array<i64: 1, 64>}, {pipeline_mode = #tpu.pipeline_mode<synchronous>, transform_indices = @transform_3, window_bounds = array<i64: 16, 64>}]} {
    %c0 = arith.constant 0 : index
    %c0_0 = arith.constant 0 : index
    %0 = vector.load %arg1[%c0, %c0_0] : memref<16x64xf32, #tpu.memory_space<vmem>>, vector<16x64xf32>
    %c0_1 = arith.constant 0 : index
    %c0_2 = arith.constant 0 : index
    %1 = vector.load %arg2[%c0_1, %c0_2] : memref<1x64xf32, #tpu.memory_space<vmem>>, vector<1x64xf32>
    %c0_3 = arith.constant 0 : index
    %c0_4 = arith.constant 0 : index
    %2 = vector.load %arg3[%c0_3, %c0_4] : memref<1x64xf32, #tpu.memory_space<vmem>>, vector<1x64xf32>
    %cst = arith.constant dense<0.000000e+00> : vector<16xf32>
    %3 = vector.multi_reduction <add>, %0, %cst [1] : vector<16x64xf32> to vector<16xf32>
    %4 = vector.shape_cast %3 : vector<16xf32> to vector<16x1xf32>
    %cst_5 = arith.constant 6.400000e+01 : f32
    %5 = vector.broadcast %cst_5 : f32 to vector<16x1xf32>
    %6 = arith.divf %4, %5 : vector<16x1xf32>
    %7 = vector.broadcast %6 : vector<16x1xf32> to vector<16x64xf32>
    %8 = arith.subf %0, %7 : vector<16x64xf32>
    %9 = arith.mulf %8, %8 : vector<16x64xf32>
    %cst_6 = arith.constant dense<0.000000e+00> : vector<16xf32>
    %10 = vector.multi_reduction <add>, %9, %cst_6 [1] : vector<16x64xf32> to vector<16xf32>
    %11 = vector.shape_cast %10 : vector<16xf32> to vector<16x1xf32>
    %cst_7 = arith.constant 6.400000e+01 : f32
    %12 = vector.broadcast %cst_7 : f32 to vector<16x1xf32>
    %13 = arith.divf %11, %12 : vector<16x1xf32>
    %14 = vector.broadcast %6 : vector<16x1xf32> to vector<16x64xf32>
    %15 = arith.subf %0, %14 : vector<16x64xf32>
    %cst_8 = arith.constant 9.99999974E-6 : f32
    %16 = vector.broadcast %cst_8 : f32 to vector<16x1xf32>
    %17 = arith.addf %13, %16 : vector<16x1xf32>
    %18 = math.rsqrt %17 : vector<16x1xf32>
    %19 = vector.broadcast %18 : vector<16x1xf32> to vector<16x64xf32>
    %20 = arith.mulf %15, %19 : vector<16x64xf32>
    %21 = vector.broadcast %1 : vector<1x64xf32> to vector<16x64xf32>
    %22 = arith.mulf %20, %21 : vector<16x64xf32>
    %23 = vector.broadcast %2 : vector<1x64xf32> to vector<16x64xf32>
    %24 = arith.addf %22, %23 : vector<16x64xf32>
    %c0_9 = arith.constant 0 : index
    %c0_10 = arith.constant 0 : index
    %25 = vector.load %arg4[%c0_9, %c0_10] : memref<16x64xf32, #tpu.memory_space<vmem>>, vector<16x64xf32>
    tpu.vector_store %arg4[%c0_9, %c0_10], %24 {strides = array<i32>} : memref<16x64xf32, #tpu.memory_space<vmem>>, vector<16x64xf32>,
    return
  }
  func.func @transform_0(%arg0: i32) -> (i32, i32) {
    %c0_i32 = arith.constant 0 : i32
    %c0_i32_0 = arith.constant 0 : i32
    %c0_i32_1 = arith.constant 0 : i32
    return %c0_i32, %c0_i32_0 : i32, i32
  }
  func.func @transform_1(%arg0: i32) -> (i32, i32) {
    %c0_i32 = arith.constant 0 : i32
    %c0_i32_0 = arith.constant 0 : i32
    %c0_i32_1 = arith.constant 0 : i32
    return %c0_i32, %c0_i32_0 : i32, i32
  }
  func.func @transform_2(%arg0: i32) -> (i32, i32) {
    %c0_i32 = arith.constant 0 : i32
    %c0_i32_0 = arith.constant 0 : i32
    %c0_i32_1 = arith.constant 0 : i32
    return %c0_i32, %c0_i32_0 : i32, i32
  }
  func.func @transform_3(%arg0: i32) -> (i32, i32) {
    %c0_i32 = arith.constant 0 : i32
    %c0_i32_0 = arith.constant 0 : i32
    %c0_i32_1 = arith.constant 0 : i32
    return %c0_i32, %c0_i32_0 : i32, i32
  }
}

module attributes {stable_mosaic.version = 11 : i64} {
  func.func @_encoder_layer_kernel(%arg0: i32, %arg1: memref<1x8x64xf32, #tpu.memory_space<vmem>>, %arg2: memref<1x1x8xf32, #tpu.memory_space<vmem>>, %arg3: memref<64x192xbf16, #tpu.memory_space<vmem>>, %arg4: memref<1x192xf32, #tpu.memory_space<vmem>>, %arg5: memref<64x16xbf16, #tpu.memory_space<vmem>>, %arg6: memref<16x128xbf16, #tpu.memory_space<vmem>>, %arg7: memref<64x64xbf16, #tpu.memory_space<vmem>>, %arg8: memref<1x64xf32, #tpu.memory_space<vmem>>, %arg9: memref<1x64xf32, #tpu.memory_space<vmem>>, %arg10: memref<1x64xf32, #tpu.memory_space<vmem>>, %arg11: memref<64x128xbf16, #tpu.memory_space<vmem>>, %arg12: memref<1x128xf32, #tpu.memory_space<vmem>>, %arg13: memref<128x64xbf16, #tpu.memory_space<vmem>>, %arg14: memref<1x64xf32, #tpu.memory_space<vmem>>, %arg15: memref<1x64xf32, #tpu.memory_space<vmem>>, %arg16: memref<1x64xf32, #tpu.memory_space<vmem>>, %arg17: memref<1x8x64xf32, #tpu.memory_space<vmem>>) attributes {dimension_semantics = [#tpu.dimension_semantics<parallel>], iteration_bounds = array<i64: 2>, scalar_prefetch = 0 : i64, scratch_operands = 0 : i64, tpu.core_type = #tpu.core_type<tc>, window_params = [{transform_indices = @transform_0, window_bounds = array<i64: 1, 8, 64>}, {transform_indices = @transform_1, window_bounds = array<i64: 1, 1, 8>}, {pipeline_mode = #tpu.pipeline_mode<synchronous>, transform_indices = @transform_2, window_bounds = array<i64: 64, 192>}, {pipeline_mode = #tpu.pipeline_mode<synchronous>, transform_indices = @transform_3, window_bounds = array<i64: 1, 192>}, {pipeline_mode = #tpu.pipeline_mode<synchronous>, transform_indices = @transform_4, window_bounds = array<i64: 64, 16>}, {pipeline_mode = #tpu.pipeline_mode<synchronous>, transform_indices = @transform_5, window_bounds = array<i64: 16, 128>}, {pipeline_mode = #tpu.pipeline_mode<synchronous>, transform_indices = @transform_6, window_bounds = array<i64: 64, 64>}, {pipeline_mode = #tpu.pipeline_mode<synchronous>, transform_indices = @transform_7, window_bounds = array<i64: 1, 64>}, {pipeline_mode = #tpu.pipeline_mode<synchronous>, transform_indices = @transform_8, window_bounds = array<i64: 1, 64>}, {pipeline_mode = #tpu.pipeline_mode<synchronous>, transform_indices = @transform_9, window_bounds = array<i64: 1, 64>}, {pipeline_mode = #tpu.pipeline_mode<synchronous>, transform_indices = @transform_10, window_bounds = array<i64: 64, 128>}, {pipeline_mode = #tpu.pipeline_mode<synchronous>, transform_indices = @transform_11, window_bounds = array<i64: 1, 128>}, {pipeline_mode = #tpu.pipeline_mode<synchronous>, transform_indices = @transform_12, window_bounds = array<i64: 128, 64>}, {pipeline_mode = #tpu.pipeline_mode<synchronous>, transform_indices = @transform_13, window_bounds = array<i64: 1, 64>}, {pipeline_mode = #tpu.pipeline_mode<synchronous>, transform_indices = @transform_14, window_bounds = array<i64: 1, 64>}, {pipeline_mode = #tpu.pipeline_mode<synchronous>, transform_indices = @transform_15, window_bounds = array<i64: 1, 64>}, {transform_indices = @transform_16, window_bounds = array<i64: 1, 8, 64>}]} {
    %c0 = arith.constant 0 : index
    %c0_0 = arith.constant 0 : index
    %c0_1 = arith.constant 0 : index
    %0 = vector.load %arg1[%c0, %c0_0, %c0_1] : memref<1x8x64xf32, #tpu.memory_space<vmem>>, vector<1x8x64xf32>
    %1 = vector.shape_cast %0 : vector<1x8x64xf32> to vector<8x64xf32>
    %2 = arith.truncf %1 : vector<8x64xf32> to vector<8x64xbf16>
    %c0_2 = arith.constant 0 : index
    %c0_3 = arith.constant 0 : index
    %3 = vector.load %arg3[%c0_2, %c0_3] : memref<64x192xbf16, #tpu.memory_space<vmem>>, vector<64x192xbf16>
    %cst = arith.constant dense<0.000000e+00> : vector<8x192xf32>
    %4 = tpu.matmul %2, %3, %cst {dimension_numbers = #tpu.dot_dimension_numbers<[1], [0], [0], [1], [0, 0, 1, 1], [], []>} : vector<8x64xbf16>, vector<64x192xbf16>, vector<8x192xf32> -> vector<8x192xf32>
    %c0_4 = arith.constant 0 : index
    %c0_5 = arith.constant 0 : index
    %5 = vector.load %arg4[%c0_4, %c0_5] : memref<1x192xf32, #tpu.memory_space<vmem>>, vector<1x192xf32>
    %6 = vector.broadcast %5 : vector<1x192xf32> to vector<8x192xf32>
    %7 = arith.addf %4, %6 : vector<8x192xf32>
    %c0_6 = arith.constant 0 : index
    %c0_7 = arith.constant 0 : index
    %8 = vector.load %arg5[%c0_6, %c0_7] : memref<64x16xbf16, #tpu.memory_space<vmem>>, vector<64x16xbf16>
    %cst_8 = arith.constant dense<0.000000e+00> : vector<8x16xf32>
    %9 = tpu.matmul %2, %8, %cst_8 {dimension_numbers = #tpu.dot_dimension_numbers<[1], [0], [0], [1], [0, 0, 1, 1], [], []>} : vector<8x64xbf16>, vector<64x16xbf16>, vector<8x16xf32> -> vector<8x16xf32>
    %10 = arith.truncf %9 : vector<8x16xf32> to vector<8x16xbf16>
    %c0_9 = arith.constant 0 : index
    %c0_10 = arith.constant 0 : index
    %11 = vector.load %arg6[%c0_9, %c0_10] : memref<16x128xbf16, #tpu.memory_space<vmem>>, vector<16x128xbf16>
    %cst_11 = arith.constant dense<0.000000e+00> : vector<8x128xf32>
    %12 = tpu.matmul %10, %11, %cst_11 {dimension_numbers = #tpu.dot_dimension_numbers<[1], [0], [0], [1], [0, 0, 1, 1], [], []>} : vector<8x16xbf16>, vector<16x128xbf16>, vector<8x128xf32> -> vector<8x128xf32>
    %13 = vector.extract_strided_slice %7 {offsets = [0, 0], sizes = [8, 64], strides = [1, 1]} : vector<8x192xf32> to vector<8x64xf32>
    %14 = vector.extract_strided_slice %12 {offsets = [0, 0], sizes = [8, 64], strides = [1, 1]} : vector<8x128xf32> to vector<8x64xf32>
    %15 = arith.addf %13, %14 : vector<8x64xf32>
    %16 = vector.extract_strided_slice %7 {offsets = [0, 64], sizes = [8, 64], strides = [1, 1]} : vector<8x192xf32> to vector<8x64xf32>
    %17 = vector.extract_strided_slice %7 {offsets = [0, 128], sizes = [8, 64], strides = [1, 1]} : vector<8x192xf32> to vector<8x64xf32>
    %18 = vector.extract_strided_slice %12 {offsets = [0, 64], sizes = [8, 64], strides = [1, 1]} : vector<8x128xf32> to vector<8x64xf32>
    %19 = arith.addf %17, %18 : vector<8x64xf32>
    %c0_12 = arith.constant 0 : index
    %c0_13 = arith.constant 0 : index
    %c0_14 = arith.constant 0 : index
    %20 = vector.load %arg2[%c0_12, %c0_13, %c0_14] : memref<1x1x8xf32, #tpu.memory_space<vmem>>, vector<1x1x8xf32>
    %21 = vector.shape_cast %20 : vector<1x1x8xf32> to vector<1x8xf32>
    %22 = vector.extract_strided_slice %15 {offsets = [0, 0], sizes = [8, 16], strides = [1, 1]} : vector<8x64xf32> to vector<8x16xf32>
    %23 = arith.truncf %22 : vector<8x16xf32> to vector<8x16xbf16>
    %24 = vector.extract_strided_slice %16 {offsets = [0, 0], sizes = [8, 16], strides = [1, 1]} : vector<8x64xf32> to vector<8x16xf32>
    %25 = arith.truncf %24 : vector<8x16xf32> to vector<8x16xbf16>
    %26 = vector.extract_strided_slice %19 {offsets = [0, 0], sizes = [8, 16], strides = [1, 1]} : vector<8x64xf32> to vector<8x16xf32>
    %27 = arith.truncf %26 : vector<8x16xf32> to vector<8x16xbf16>
    %cst_15 = arith.constant dense<0.000000e+00> : vector<8x8xf32>
    %28 = tpu.matmul %23, %25, %cst_15 {dimension_numbers = #tpu.dot_dimension_numbers<[1], [1], [0], [0], [0, 0, 1, 0], [], []>} : vector<8x16xbf16>, vector<8x16xbf16>, vector<8x8xf32> -> vector<8x8xf32>
    %cst_16 = arith.constant 2.500000e-01 : f32
    %29 = vector.broadcast %cst_16 : f32 to vector<8x8xf32>
    %30 = arith.mulf %28, %29 : vector<8x8xf32>
    %31 = vector.broadcast %21 : vector<1x8xf32> to vector<8x8xf32>
    %32 = arith.addf %30, %31 : vector<8x8xf32>
    %cst_17 = arith.constant dense<0xFF800000> : vector<8xf32>
    %33 = vector.multi_reduction <maximumf>, %32, %cst_17 [1] : vector<8x8xf32> to vector<8xf32>
    %34 = vector.shape_cast %33 : vector<8xf32> to vector<8x1xf32>
    %35 = vector.broadcast %34 : vector<8x1xf32> to vector<8x8xf32>
    %36 = arith.subf %32, %35 : vector<8x8xf32>
    %37 = math.exp %36 : vector<8x8xf32>
    %cst_18 = arith.constant dense<0.000000e+00> : vector<8xf32>
    %38 = vector.multi_reduction <add>, %37, %cst_18 [1] : vector<8x8xf32> to vector<8xf32>
    %39 = vector.shape_cast %38 : vector<8xf32> to vector<8x1xf32>
    %40 = tpu.reciprocal %39 {approx = true} : vector<8x1xf32> -> vector<8x1xf32>
    %41 = vector.broadcast %40 : vector<8x1xf32> to vector<8x8xf32>
    %42 = arith.mulf %37, %41 : vector<8x8xf32>
    %43 = arith.truncf %42 : vector<8x8xf32> to vector<8x8xbf16>
    %cst_19 = arith.constant dense<0.000000e+00> : vector<8x16xf32>
    %44 = tpu.matmul %43, %27, %cst_19 {dimension_numbers = #tpu.dot_dimension_numbers<[1], [0], [0], [1], [0, 0, 1, 1], [], []>} : vector<8x8xbf16>, vector<8x16xbf16>, vector<8x16xf32> -> vector<8x16xf32>
    %45 = vector.extract_strided_slice %15 {offsets = [0, 16], sizes = [8, 16], strides = [1, 1]} : vector<8x64xf32> to vector<8x16xf32>
    %46 = arith.truncf %45 : vector<8x16xf32> to vector<8x16xbf16>
    %47 = vector.extract_strided_slice %16 {offsets = [0, 16], sizes = [8, 16], strides = [1, 1]} : vector<8x64xf32> to vector<8x16xf32>
    %48 = arith.truncf %47 : vector<8x16xf32> to vector<8x16xbf16>
    %49 = vector.extract_strided_slice %19 {offsets = [0, 16], sizes = [8, 16], strides = [1, 1]} : vector<8x64xf32> to vector<8x16xf32>
    %50 = arith.truncf %49 : vector<8x16xf32> to vector<8x16xbf16>
    %cst_20 = arith.constant dense<0.000000e+00> : vector<8x8xf32>
    %51 = tpu.matmul %46, %48, %cst_20 {dimension_numbers = #tpu.dot_dimension_numbers<[1], [1], [0], [0], [0, 0, 1, 0], [], []>} : vector<8x16xbf16>, vector<8x16xbf16>, vector<8x8xf32> -> vector<8x8xf32>
    %cst_21 = arith.constant 2.500000e-01 : f32
    %52 = vector.broadcast %cst_21 : f32 to vector<8x8xf32>
    %53 = arith.mulf %51, %52 : vector<8x8xf32>
    %54 = vector.broadcast %21 : vector<1x8xf32> to vector<8x8xf32>
    %55 = arith.addf %53, %54 : vector<8x8xf32>
    %cst_22 = arith.constant dense<0xFF800000> : vector<8xf32>
    %56 = vector.multi_reduction <maximumf>, %55, %cst_22 [1] : vector<8x8xf32> to vector<8xf32>
    %57 = vector.shape_cast %56 : vector<8xf32> to vector<8x1xf32>
    %58 = vector.broadcast %57 : vector<8x1xf32> to vector<8x8xf32>
    %59 = arith.subf %55, %58 : vector<8x8xf32>
    %60 = math.exp %59 : vector<8x8xf32>
    %cst_23 = arith.constant dense<0.000000e+00> : vector<8xf32>
    %61 = vector.multi_reduction <add>, %60, %cst_23 [1] : vector<8x8xf32> to vector<8xf32>
    %62 = vector.shape_cast %61 : vector<8xf32> to vector<8x1xf32>
    %63 = tpu.reciprocal %62 {approx = true} : vector<8x1xf32> -> vector<8x1xf32>
    %64 = vector.broadcast %63 : vector<8x1xf32> to vector<8x8xf32>
    %65 = arith.mulf %60, %64 : vector<8x8xf32>
    %66 = arith.truncf %65 : vector<8x8xf32> to vector<8x8xbf16>
    %cst_24 = arith.constant dense<0.000000e+00> : vector<8x16xf32>
    %67 = tpu.matmul %66, %50, %cst_24 {dimension_numbers = #tpu.dot_dimension_numbers<[1], [0], [0], [1], [0, 0, 1, 1], [], []>} : vector<8x8xbf16>, vector<8x16xbf16>, vector<8x16xf32> -> vector<8x16xf32>
    %68 = vector.extract_strided_slice %15 {offsets = [0, 32], sizes = [8, 16], strides = [1, 1]} : vector<8x64xf32> to vector<8x16xf32>
    %69 = arith.truncf %68 : vector<8x16xf32> to vector<8x16xbf16>
    %70 = vector.extract_strided_slice %16 {offsets = [0, 32], sizes = [8, 16], strides = [1, 1]} : vector<8x64xf32> to vector<8x16xf32>
    %71 = arith.truncf %70 : vector<8x16xf32> to vector<8x16xbf16>
    %72 = vector.extract_strided_slice %19 {offsets = [0, 32], sizes = [8, 16], strides = [1, 1]} : vector<8x64xf32> to vector<8x16xf32>
    %73 = arith.truncf %72 : vector<8x16xf32> to vector<8x16xbf16>
    %cst_25 = arith.constant dense<0.000000e+00> : vector<8x8xf32>
    %74 = tpu.matmul %69, %71, %cst_25 {dimension_numbers = #tpu.dot_dimension_numbers<[1], [1], [0], [0], [0, 0, 1, 0], [], []>} : vector<8x16xbf16>, vector<8x16xbf16>, vector<8x8xf32> -> vector<8x8xf32>
    %cst_26 = arith.constant 2.500000e-01 : f32
    %75 = vector.broadcast %cst_26 : f32 to vector<8x8xf32>
    %76 = arith.mulf %74, %75 : vector<8x8xf32>
    %77 = vector.broadcast %21 : vector<1x8xf32> to vector<8x8xf32>
    %78 = arith.addf %76, %77 : vector<8x8xf32>
    %cst_27 = arith.constant dense<0xFF800000> : vector<8xf32>
    %79 = vector.multi_reduction <maximumf>, %78, %cst_27 [1] : vector<8x8xf32> to vector<8xf32>
    %80 = vector.shape_cast %79 : vector<8xf32> to vector<8x1xf32>
    %81 = vector.broadcast %80 : vector<8x1xf32> to vector<8x8xf32>
    %82 = arith.subf %78, %81 : vector<8x8xf32>
    %83 = math.exp %82 : vector<8x8xf32>
    %cst_28 = arith.constant dense<0.000000e+00> : vector<8xf32>
    %84 = vector.multi_reduction <add>, %83, %cst_28 [1] : vector<8x8xf32> to vector<8xf32>
    %85 = vector.shape_cast %84 : vector<8xf32> to vector<8x1xf32>
    %86 = tpu.reciprocal %85 {approx = true} : vector<8x1xf32> -> vector<8x1xf32>
    %87 = vector.broadcast %86 : vector<8x1xf32> to vector<8x8xf32>
    %88 = arith.mulf %83, %87 : vector<8x8xf32>
    %89 = arith.truncf %88 : vector<8x8xf32> to vector<8x8xbf16>
    %cst_29 = arith.constant dense<0.000000e+00> : vector<8x16xf32>
    %90 = tpu.matmul %89, %73, %cst_29 {dimension_numbers = #tpu.dot_dimension_numbers<[1], [0], [0], [1], [0, 0, 1, 1], [], []>} : vector<8x8xbf16>, vector<8x16xbf16>, vector<8x16xf32> -> vector<8x16xf32>
    %91 = vector.extract_strided_slice %15 {offsets = [0, 48], sizes = [8, 16], strides = [1, 1]} : vector<8x64xf32> to vector<8x16xf32>
    %92 = arith.truncf %91 : vector<8x16xf32> to vector<8x16xbf16>
    %93 = vector.extract_strided_slice %16 {offsets = [0, 48], sizes = [8, 16], strides = [1, 1]} : vector<8x64xf32> to vector<8x16xf32>
    %94 = arith.truncf %93 : vector<8x16xf32> to vector<8x16xbf16>
    %95 = vector.extract_strided_slice %19 {offsets = [0, 48], sizes = [8, 16], strides = [1, 1]} : vector<8x64xf32> to vector<8x16xf32>
    %96 = arith.truncf %95 : vector<8x16xf32> to vector<8x16xbf16>
    %cst_30 = arith.constant dense<0.000000e+00> : vector<8x8xf32>
    %97 = tpu.matmul %92, %94, %cst_30 {dimension_numbers = #tpu.dot_dimension_numbers<[1], [1], [0], [0], [0, 0, 1, 0], [], []>} : vector<8x16xbf16>, vector<8x16xbf16>, vector<8x8xf32> -> vector<8x8xf32>
    %cst_31 = arith.constant 2.500000e-01 : f32
    %98 = vector.broadcast %cst_31 : f32 to vector<8x8xf32>
    %99 = arith.mulf %97, %98 : vector<8x8xf32>
    %100 = vector.broadcast %21 : vector<1x8xf32> to vector<8x8xf32>
    %101 = arith.addf %99, %100 : vector<8x8xf32>
    %cst_32 = arith.constant dense<0xFF800000> : vector<8xf32>
    %102 = vector.multi_reduction <maximumf>, %101, %cst_32 [1] : vector<8x8xf32> to vector<8xf32>
    %103 = vector.shape_cast %102 : vector<8xf32> to vector<8x1xf32>
    %104 = vector.broadcast %103 : vector<8x1xf32> to vector<8x8xf32>
    %105 = arith.subf %101, %104 : vector<8x8xf32>
    %106 = math.exp %105 : vector<8x8xf32>
    %cst_33 = arith.constant dense<0.000000e+00> : vector<8xf32>
    %107 = vector.multi_reduction <add>, %106, %cst_33 [1] : vector<8x8xf32> to vector<8xf32>
    %108 = vector.shape_cast %107 : vector<8xf32> to vector<8x1xf32>
    %109 = tpu.reciprocal %108 {approx = true} : vector<8x1xf32> -> vector<8x1xf32>
    %110 = vector.broadcast %109 : vector<8x1xf32> to vector<8x8xf32>
    %111 = arith.mulf %106, %110 : vector<8x8xf32>
    %112 = arith.truncf %111 : vector<8x8xf32> to vector<8x8xbf16>
    %cst_34 = arith.constant dense<0.000000e+00> : vector<8x16xf32>
    %113 = tpu.matmul %112, %96, %cst_34 {dimension_numbers = #tpu.dot_dimension_numbers<[1], [0], [0], [1], [0, 0, 1, 1], [], []>} : vector<8x8xbf16>, vector<8x16xbf16>, vector<8x16xf32> -> vector<8x16xf32>
    %114 = tpu.concatenate %44, %67, %90, %113 in 1 : vector<8x16xf32>, vector<8x16xf32>, vector<8x16xf32>, vector<8x16xf32> -> vector<8x64xf32>
    %115 = arith.truncf %114 : vector<8x64xf32> to vector<8x64xbf16>
    %c0_35 = arith.constant 0 : index
    %c0_36 = arith.constant 0 : index
    %116 = vector.load %arg7[%c0_35, %c0_36] : memref<64x64xbf16, #tpu.memory_space<vmem>>, vector<64x64xbf16>
    %cst_37 = arith.constant dense<0.000000e+00> : vector<8x64xf32>
    %117 = tpu.matmul %115, %116, %cst_37 {dimension_numbers = #tpu.dot_dimension_numbers<[1], [0], [0], [1], [0, 0, 1, 1], [], []>} : vector<8x64xbf16>, vector<64x64xbf16>, vector<8x64xf32> -> vector<8x64xf32>
    %c0_38 = arith.constant 0 : index
    %c0_39 = arith.constant 0 : index
    %118 = vector.load %arg8[%c0_38, %c0_39] : memref<1x64xf32, #tpu.memory_space<vmem>>, vector<1x64xf32>
    %119 = vector.broadcast %118 : vector<1x64xf32> to vector<8x64xf32>
    %120 = arith.addf %117, %119 : vector<8x64xf32>
    %121 = arith.addf %120, %1 : vector<8x64xf32>
    %c0_40 = arith.constant 0 : index
    %c0_41 = arith.constant 0 : index
    %122 = vector.load %arg9[%c0_40, %c0_41] : memref<1x64xf32, #tpu.memory_space<vmem>>, vector<1x64xf32>
    %c0_42 = arith.constant 0 : index
    %c0_43 = arith.constant 0 : index
    %123 = vector.load %arg10[%c0_42, %c0_43] : memref<1x64xf32, #tpu.memory_space<vmem>>, vector<1x64xf32>
    %cst_44 = arith.constant dense<0.000000e+00> : vector<8xf32>
    %124 = vector.multi_reduction <add>, %121, %cst_44 [1] : vector<8x64xf32> to vector<8xf32>
    %125 = vector.shape_cast %124 : vector<8xf32> to vector<8x1xf32>
    %cst_45 = arith.constant 6.400000e+01 : f32
    %126 = vector.broadcast %cst_45 : f32 to vector<8x1xf32>
    %127 = arith.divf %125, %126 : vector<8x1xf32>
    %128 = vector.broadcast %127 : vector<8x1xf32> to vector<8x64xf32>
    %129 = arith.subf %121, %128 : vector<8x64xf32>
    %130 = arith.mulf %129, %129 : vector<8x64xf32>
    %cst_46 = arith.constant dense<0.000000e+00> : vector<8xf32>
    %131 = vector.multi_reduction <add>, %130, %cst_46 [1] : vector<8x64xf32> to vector<8xf32>
    %132 = vector.shape_cast %131 : vector<8xf32> to vector<8x1xf32>
    %cst_47 = arith.constant 6.400000e+01 : f32
    %133 = vector.broadcast %cst_47 : f32 to vector<8x1xf32>
    %134 = arith.divf %132, %133 : vector<8x1xf32>
    %135 = vector.broadcast %127 : vector<8x1xf32> to vector<8x64xf32>
    %136 = arith.subf %121, %135 : vector<8x64xf32>
    %cst_48 = arith.constant 9.99999974E-6 : f32
    %137 = vector.broadcast %cst_48 : f32 to vector<8x1xf32>
    %138 = arith.addf %134, %137 : vector<8x1xf32>
    %139 = math.rsqrt %138 : vector<8x1xf32>
    %140 = vector.broadcast %139 : vector<8x1xf32> to vector<8x64xf32>
    %141 = arith.mulf %136, %140 : vector<8x64xf32>
    %142 = vector.broadcast %122 : vector<1x64xf32> to vector<8x64xf32>
    %143 = arith.mulf %141, %142 : vector<8x64xf32>
    %144 = vector.broadcast %123 : vector<1x64xf32> to vector<8x64xf32>
    %145 = arith.addf %143, %144 : vector<8x64xf32>
    %146 = arith.truncf %145 : vector<8x64xf32> to vector<8x64xbf16>
    %c0_49 = arith.constant 0 : index
    %c0_50 = arith.constant 0 : index
    %147 = vector.load %arg11[%c0_49, %c0_50] : memref<64x128xbf16, #tpu.memory_space<vmem>>, vector<64x128xbf16>
    %cst_51 = arith.constant dense<0.000000e+00> : vector<8x128xf32>
    %148 = tpu.matmul %146, %147, %cst_51 {dimension_numbers = #tpu.dot_dimension_numbers<[1], [0], [0], [1], [0, 0, 1, 1], [], []>} : vector<8x64xbf16>, vector<64x128xbf16>, vector<8x128xf32> -> vector<8x128xf32>
    %c0_52 = arith.constant 0 : index
    %c0_53 = arith.constant 0 : index
    %149 = vector.load %arg12[%c0_52, %c0_53] : memref<1x128xf32, #tpu.memory_space<vmem>>, vector<1x128xf32>
    %150 = vector.broadcast %149 : vector<1x128xf32> to vector<8x128xf32>
    %151 = arith.addf %148, %150 : vector<8x128xf32>
    %cst_54 = arith.constant 5.000000e-01 : f32
    %152 = vector.broadcast %cst_54 : f32 to vector<8x128xf32>
    %153 = arith.mulf %152, %151 : vector<8x128xf32>
    %cst_55 = arith.constant 0.707106769 : f32
    %154 = vector.broadcast %cst_55 : f32 to vector<8x128xf32>
    %155 = arith.mulf %151, %154 : vector<8x128xf32>
    %156 = math.erf %155 : vector<8x128xf32>
    %cst_56 = arith.constant 1.000000e+00 : f32
    %157 = vector.broadcast %cst_56 : f32 to vector<8x128xf32>
    %158 = arith.addf %157, %156 : vector<8x128xf32>
    %159 = arith.mulf %153, %158 : vector<8x128xf32>
    %160 = arith.truncf %159 : vector<8x128xf32> to vector<8x128xbf16>
    %c0_57 = arith.constant 0 : index
    %c0_58 = arith.constant 0 : index
    %161 = vector.load %arg13[%c0_57, %c0_58] : memref<128x64xbf16, #tpu.memory_space<vmem>>, vector<128x64xbf16>
    %cst_59 = arith.constant dense<0.000000e+00> : vector<8x64xf32>
    %162 = tpu.matmul %160, %161, %cst_59 {dimension_numbers = #tpu.dot_dimension_numbers<[1], [0], [0], [1], [0, 0, 1, 1], [], []>} : vector<8x128xbf16>, vector<128x64xbf16>, vector<8x64xf32> -> vector<8x64xf32>
    %c0_60 = arith.constant 0 : index
    %c0_61 = arith.constant 0 : index
    %163 = vector.load %arg14[%c0_60, %c0_61] : memref<1x64xf32, #tpu.memory_space<vmem>>, vector<1x64xf32>
    %164 = vector.broadcast %163 : vector<1x64xf32> to vector<8x64xf32>
    %165 = arith.addf %162, %164 : vector<8x64xf32>
    %166 = arith.addf %165, %145 : vector<8x64xf32>
    %c0_62 = arith.constant 0 : index
    %c0_63 = arith.constant 0 : index
    %167 = vector.load %arg15[%c0_62, %c0_63] : memref<1x64xf32, #tpu.memory_space<vmem>>, vector<1x64xf32>
    %c0_64 = arith.constant 0 : index
    %c0_65 = arith.constant 0 : index
    %168 = vector.load %arg16[%c0_64, %c0_65] : memref<1x64xf32, #tpu.memory_space<vmem>>, vector<1x64xf32>
    %cst_66 = arith.constant dense<0.000000e+00> : vector<8xf32>
    %169 = vector.multi_reduction <add>, %166, %cst_66 [1] : vector<8x64xf32> to vector<8xf32>
    %170 = vector.shape_cast %169 : vector<8xf32> to vector<8x1xf32>
    %cst_67 = arith.constant 6.400000e+01 : f32
    %171 = vector.broadcast %cst_67 : f32 to vector<8x1xf32>
    %172 = arith.divf %170, %171 : vector<8x1xf32>
    %173 = vector.broadcast %172 : vector<8x1xf32> to vector<8x64xf32>
    %174 = arith.subf %166, %173 : vector<8x64xf32>
    %175 = arith.mulf %174, %174 : vector<8x64xf32>
    %cst_68 = arith.constant dense<0.000000e+00> : vector<8xf32>
    %176 = vector.multi_reduction <add>, %175, %cst_68 [1] : vector<8x64xf32> to vector<8xf32>
    %177 = vector.shape_cast %176 : vector<8xf32> to vector<8x1xf32>
    %cst_69 = arith.constant 6.400000e+01 : f32
    %178 = vector.broadcast %cst_69 : f32 to vector<8x1xf32>
    %179 = arith.divf %177, %178 : vector<8x1xf32>
    %180 = vector.broadcast %172 : vector<8x1xf32> to vector<8x64xf32>
    %181 = arith.subf %166, %180 : vector<8x64xf32>
    %cst_70 = arith.constant 9.99999974E-6 : f32
    %182 = vector.broadcast %cst_70 : f32 to vector<8x1xf32>
    %183 = arith.addf %179, %182 : vector<8x1xf32>
    %184 = math.rsqrt %183 : vector<8x1xf32>
    %185 = vector.broadcast %184 : vector<8x1xf32> to vector<8x64xf32>
    %186 = arith.mulf %181, %185 : vector<8x64xf32>
    %187 = vector.broadcast %167 : vector<1x64xf32> to vector<8x64xf32>
    %188 = arith.mulf %186, %187 : vector<8x64xf32>
    %189 = vector.broadcast %168 : vector<1x64xf32> to vector<8x64xf32>
    %190 = arith.addf %188, %189 : vector<8x64xf32>
    %c0_71 = arith.constant 0 : index
    %c0_72 = arith.constant 0 : index
    %c0_73 = arith.constant 0 : index
    %191 = vector.load %arg17[%c0_71, %c0_72, %c0_73] : memref<1x8x64xf32, #tpu.memory_space<vmem>>, vector<1x8x64xf32>
    %192 = vector.shape_cast %191 : vector<1x8x64xf32> to vector<8x64xf32>
    %193 = vector.shape_cast %190 : vector<8x64xf32> to vector<1x8x64xf32>
    tpu.vector_store %arg17[%c0_71, %c0_72, %c0_73], %193 {strides = array<i32>} : memref<1x8x64xf32, #tpu.memory_space<vmem>>, vector<1x8x64xf32>,
    return
  }
  func.func @transform_0(%arg0: i32) -> (i32, i32, i32) {
    %c0_i32 = arith.constant 0 : i32
    %c0_i32_0 = arith.constant 0 : i32
    %c0_i32_1 = arith.constant 0 : i32
    return %arg0, %c0_i32, %c0_i32_0 : i32, i32, i32
  }
  func.func @transform_1(%arg0: i32) -> (i32, i32, i32) {
    %c0_i32 = arith.constant 0 : i32
    %c0_i32_0 = arith.constant 0 : i32
    %c0_i32_1 = arith.constant 0 : i32
    return %arg0, %c0_i32, %c0_i32_0 : i32, i32, i32
  }
  func.func @transform_2(%arg0: i32) -> (i32, i32) {
    %c0_i32 = arith.constant 0 : i32
    %c0_i32_0 = arith.constant 0 : i32
    %c0_i32_1 = arith.constant 0 : i32
    return %c0_i32, %c0_i32_0 : i32, i32
  }
  func.func @transform_3(%arg0: i32) -> (i32, i32) {
    %c0_i32 = arith.constant 0 : i32
    %c0_i32_0 = arith.constant 0 : i32
    %c0_i32_1 = arith.constant 0 : i32
    return %c0_i32, %c0_i32_0 : i32, i32
  }
  func.func @transform_4(%arg0: i32) -> (i32, i32) {
    %c0_i32 = arith.constant 0 : i32
    %c0_i32_0 = arith.constant 0 : i32
    %c0_i32_1 = arith.constant 0 : i32
    return %c0_i32, %c0_i32_0 : i32, i32
  }
  func.func @transform_5(%arg0: i32) -> (i32, i32) {
    %c0_i32 = arith.constant 0 : i32
    %c0_i32_0 = arith.constant 0 : i32
    %c0_i32_1 = arith.constant 0 : i32
    return %c0_i32, %c0_i32_0 : i32, i32
  }
  func.func @transform_6(%arg0: i32) -> (i32, i32) {
    %c0_i32 = arith.constant 0 : i32
    %c0_i32_0 = arith.constant 0 : i32
    %c0_i32_1 = arith.constant 0 : i32
    return %c0_i32, %c0_i32_0 : i32, i32
  }
  func.func @transform_7(%arg0: i32) -> (i32, i32) {
    %c0_i32 = arith.constant 0 : i32
    %c0_i32_0 = arith.constant 0 : i32
    %c0_i32_1 = arith.constant 0 : i32
    return %c0_i32, %c0_i32_0 : i32, i32
  }
  func.func @transform_8(%arg0: i32) -> (i32, i32) {
    %c0_i32 = arith.constant 0 : i32
    %c0_i32_0 = arith.constant 0 : i32
    %c0_i32_1 = arith.constant 0 : i32
    return %c0_i32, %c0_i32_0 : i32, i32
  }
  func.func @transform_9(%arg0: i32) -> (i32, i32) {
    %c0_i32 = arith.constant 0 : i32
    %c0_i32_0 = arith.constant 0 : i32
    %c0_i32_1 = arith.constant 0 : i32
    return %c0_i32, %c0_i32_0 : i32, i32
  }
  func.func @transform_10(%arg0: i32) -> (i32, i32) {
    %c0_i32 = arith.constant 0 : i32
    %c0_i32_0 = arith.constant 0 : i32
    %c0_i32_1 = arith.constant 0 : i32
    return %c0_i32, %c0_i32_0 : i32, i32
  }
  func.func @transform_11(%arg0: i32) -> (i32, i32) {
    %c0_i32 = arith.constant 0 : i32
    %c0_i32_0 = arith.constant 0 : i32
    %c0_i32_1 = arith.constant 0 : i32
    return %c0_i32, %c0_i32_0 : i32, i32
  }
  func.func @transform_12(%arg0: i32) -> (i32, i32) {
    %c0_i32 = arith.constant 0 : i32
    %c0_i32_0 = arith.constant 0 : i32
    %c0_i32_1 = arith.constant 0 : i32
    return %c0_i32, %c0_i32_0 : i32, i32
  }
  func.func @transform_13(%arg0: i32) -> (i32, i32) {
    %c0_i32 = arith.constant 0 : i32
    %c0_i32_0 = arith.constant 0 : i32
    %c0_i32_1 = arith.constant 0 : i32
    return %c0_i32, %c0_i32_0 : i32, i32
  }
  func.func @transform_14(%arg0: i32) -> (i32, i32) {
    %c0_i32 = arith.constant 0 : i32
    %c0_i32_0 = arith.constant 0 : i32
    %c0_i32_1 = arith.constant 0 : i32
    return %c0_i32, %c0_i32_0 : i32, i32
  }
  func.func @transform_15(%arg0: i32) -> (i32, i32) {
    %c0_i32 = arith.constant 0 : i32
    %c0_i32_0 = arith.constant 0 : i32
    %c0_i32_1 = arith.constant 0 : i32
    return %c0_i32, %c0_i32_0 : i32, i32
  }
  func.func @transform_16(%arg0: i32) -> (i32, i32, i32) {
    %c0_i32 = arith.constant 0 : i32
    %c0_i32_0 = arith.constant 0 : i32
    %c0_i32_1 = arith.constant 0 : i32
    return %arg0, %c0_i32, %c0_i32_0 : i32, i32, i32
  }
}

module attributes {stable_mosaic.version = 11 : i64} {
  func.func @_glue_head_kernel(%arg0: i32, %arg1: memref<2x64xf32, #tpu.memory_space<vmem>>, %arg2: memref<1x64xf32, #tpu.memory_space<vmem>>, %arg3: memref<1x64xf32, #tpu.memory_space<vmem>>, %arg4: memref<64x2xbf16, #tpu.memory_space<vmem>>, %arg5: memref<1x2xf32, #tpu.memory_space<vmem>>, %arg6: memref<2x2xf32, #tpu.memory_space<vmem>>) attributes {dimension_semantics = [#tpu.dimension_semantics<arbitrary>], iteration_bounds = array<i64: 1>, scalar_prefetch = 0 : i64, scratch_operands = 0 : i64, tpu.core_type = #tpu.core_type<tc>, window_params = [{pipeline_mode = #tpu.pipeline_mode<synchronous>, transform_indices = @transform_0, window_bounds = array<i64: 2, 64>}, {pipeline_mode = #tpu.pipeline_mode<synchronous>, transform_indices = @transform_1, window_bounds = array<i64: 1, 64>}, {pipeline_mode = #tpu.pipeline_mode<synchronous>, transform_indices = @transform_2, window_bounds = array<i64: 1, 64>}, {pipeline_mode = #tpu.pipeline_mode<synchronous>, transform_indices = @transform_3, window_bounds = array<i64: 64, 2>}, {pipeline_mode = #tpu.pipeline_mode<synchronous>, transform_indices = @transform_4, window_bounds = array<i64: 1, 2>}, {pipeline_mode = #tpu.pipeline_mode<synchronous>, transform_indices = @transform_5, window_bounds = array<i64: 2, 2>}]} {
    %c0 = arith.constant 0 : index
    %c0_0 = arith.constant 0 : index
    %0 = vector.load %arg1[%c0, %c0_0] : memref<2x64xf32, #tpu.memory_space<vmem>>, vector<2x64xf32>
    %c0_1 = arith.constant 0 : index
    %c0_2 = arith.constant 0 : index
    %1 = vector.load %arg2[%c0_1, %c0_2] : memref<1x64xf32, #tpu.memory_space<vmem>>, vector<1x64xf32>
    %c0_3 = arith.constant 0 : index
    %c0_4 = arith.constant 0 : index
    %2 = vector.load %arg3[%c0_3, %c0_4] : memref<1x64xf32, #tpu.memory_space<vmem>>, vector<1x64xf32>
    %cst = arith.constant dense<0.000000e+00> : vector<2xf32>
    %3 = vector.multi_reduction <add>, %0, %cst [1] : vector<2x64xf32> to vector<2xf32>
    %4 = vector.shape_cast %3 : vector<2xf32> to vector<2x1xf32>
    %cst_5 = arith.constant 6.400000e+01 : f32
    %5 = vector.broadcast %cst_5 : f32 to vector<2x1xf32>
    %6 = arith.divf %4, %5 : vector<2x1xf32>
    %7 = vector.broadcast %6 : vector<2x1xf32> to vector<2x64xf32>
    %8 = arith.subf %0, %7 : vector<2x64xf32>
    %9 = arith.mulf %8, %8 : vector<2x64xf32>
    %cst_6 = arith.constant dense<0.000000e+00> : vector<2xf32>
    %10 = vector.multi_reduction <add>, %9, %cst_6 [1] : vector<2x64xf32> to vector<2xf32>
    %11 = vector.shape_cast %10 : vector<2xf32> to vector<2x1xf32>
    %cst_7 = arith.constant 6.400000e+01 : f32
    %12 = vector.broadcast %cst_7 : f32 to vector<2x1xf32>
    %13 = arith.divf %11, %12 : vector<2x1xf32>
    %14 = vector.broadcast %6 : vector<2x1xf32> to vector<2x64xf32>
    %15 = arith.subf %0, %14 : vector<2x64xf32>
    %cst_8 = arith.constant 9.99999974E-6 : f32
    %16 = vector.broadcast %cst_8 : f32 to vector<2x1xf32>
    %17 = arith.addf %13, %16 : vector<2x1xf32>
    %18 = math.rsqrt %17 : vector<2x1xf32>
    %19 = vector.broadcast %18 : vector<2x1xf32> to vector<2x64xf32>
    %20 = arith.mulf %15, %19 : vector<2x64xf32>
    %21 = vector.broadcast %1 : vector<1x64xf32> to vector<2x64xf32>
    %22 = arith.mulf %20, %21 : vector<2x64xf32>
    %23 = vector.broadcast %2 : vector<1x64xf32> to vector<2x64xf32>
    %24 = arith.addf %22, %23 : vector<2x64xf32>
    %25 = arith.truncf %24 : vector<2x64xf32> to vector<2x64xbf16>
    %c0_9 = arith.constant 0 : index
    %c0_10 = arith.constant 0 : index
    %26 = vector.load %arg4[%c0_9, %c0_10] : memref<64x2xbf16, #tpu.memory_space<vmem>>, vector<64x2xbf16>
    %cst_11 = arith.constant dense<0.000000e+00> : vector<2x2xf32>
    %27 = tpu.matmul %25, %26, %cst_11 {dimension_numbers = #tpu.dot_dimension_numbers<[1], [0], [0], [1], [0, 0, 1, 1], [], []>} : vector<2x64xbf16>, vector<64x2xbf16>, vector<2x2xf32> -> vector<2x2xf32>
    %c0_12 = arith.constant 0 : index
    %c0_13 = arith.constant 0 : index
    %28 = vector.load %arg5[%c0_12, %c0_13] : memref<1x2xf32, #tpu.memory_space<vmem>>, vector<1x2xf32>
    %29 = vector.broadcast %28 : vector<1x2xf32> to vector<2x2xf32>
    %30 = arith.addf %27, %29 : vector<2x2xf32>
    %c0_14 = arith.constant 0 : index
    %c0_15 = arith.constant 0 : index
    %31 = vector.load %arg6[%c0_14, %c0_15] : memref<2x2xf32, #tpu.memory_space<vmem>>, vector<2x2xf32>
    tpu.vector_store %arg6[%c0_14, %c0_15], %30 {strides = array<i32>} : memref<2x2xf32, #tpu.memory_space<vmem>>, vector<2x2xf32>,
    return
  }
  func.func @transform_0(%arg0: i32) -> (i32, i32) {
    %c0_i32 = arith.constant 0 : i32
    %c0_i32_0 = arith.constant 0 : i32
    %c0_i32_1 = arith.constant 0 : i32
    return %c0_i32, %c0_i32_0 : i32, i32
  }
  func.func @transform_1(%arg0: i32) -> (i32, i32) {
    %c0_i32 = arith.constant 0 : i32
    %c0_i32_0 = arith.constant 0 : i32
    %c0_i32_1 = arith.constant 0 : i32
    return %c0_i32, %c0_i32_0 : i32, i32
  }
  func.func @transform_2(%arg0: i32) -> (i32, i32) {
    %c0_i32 = arith.constant 0 : i32
    %c0_i32_0 = arith.constant 0 : i32
    %c0_i32_1 = arith.constant 0 : i32
    return %c0_i32, %c0_i32_0 : i32, i32
  }
  func.func @transform_3(%arg0: i32) -> (i32, i32) {
    %c0_i32 = arith.constant 0 : i32
    %c0_i32_0 = arith.constant 0 : i32
    %c0_i32_1 = arith.constant 0 : i32
    return %c0_i32, %c0_i32_0 : i32, i32
  }
  func.func @transform_4(%arg0: i32) -> (i32, i32) {
    %c0_i32 = arith.constant 0 : i32
    %c0_i32_0 = arith.constant 0 : i32
    %c0_i32_1 = arith.constant 0 : i32
    return %c0_i32, %c0_i32_0 : i32, i32
  }
  func.func @transform_5(%arg0: i32) -> (i32, i32) {
    %c0_i32 = arith.constant 0 : i32
    %c0_i32_0 = arith.constant 0 : i32
    %c0_i32_1 = arith.constant 0 : i32
    return %c0_i32, %c0_i32_0 : i32, i32
  }
}

</mosaic_0001>

<llo_original>
// kernel: forward_glue.4
$region0: #{forward_glue.4}
  #allocation0 [shape = 'u32[]', space=smem, size = 0x4, offset = 0x4, fixed_abs, tag = 'smem constant byte address 0x4 - core index']
  #allocation1 [shape = 'u32[144,128]{1,0:T(1,128)}', space=vmem, size = 0x12000, scoped, tag = 'internal scratch']
  %s0 = inlined_call_operand.vmem [shape: f32[16,64], index: 0, kind: input, shape index: {}]
  %s1 = inlined_call_operand.vmem [shape: f32[1,64], index: 1, kind: input, shape index: {}]
  %s2 = inlined_call_operand.vmem [shape: f32[1,64], index: 2, kind: input, shape index: {}]
  %s3 = inlined_call_operand.vmem [shape: f32[16,64], index: 3, kind: output, shape index: {}]
  %s4 = sld [smem:[#allocation0]]
  $region22: #{forward_glue.4} parent=0
    _
  %s6 = ssub.s32 1, %s4
  %s7 = scalar_select 0, %s6, %s4
  // Predicated region
  $region2: #{forward_glue.4} parent=0 // pred_check
    _
  $region3: #{forward_glue.4} parent=0 // pred_check_branch
    %9 = sbr.rel (0) target = $region5
  $region4: #{forward_glue.4} parent=0 // pred_region
    _
  $region5: #{forward_glue.4} parent=0 // pred_fallthru
    _
  // Predicated region
  $region6: #{forward_glue.4} parent=0 // pred_check
    _
  $region7: #{forward_glue.4} parent=0 // pred_check_branch
    %11 = sbr.rel (0) target = $region9
  $region8: #{forward_glue.4} parent=0 // pred_region
    _
  $region9: #{forward_glue.4} parent=0 // pred_fallthru
    _
  // Predicated region
  $region10: #{forward_glue.4} parent=0 // pred_check
    _
  $region11: #{forward_glue.4} parent=0 // pred_check_branch
    %13 = sbr.rel (0) target = $region13
  $region12: #{forward_glue.4} parent=0 // pred_region
    _
  $region13: #{forward_glue.4} parent=0 // pred_fallthru
    _
  %v14 = vld [vmem:[%s0] sm:$0xff]
  %v15 = vld [vmem:[%s0 + $0x8] sm:$0xff]
  %v16 = vld [vmem:[%s1] sm:$0x1]
  %v17 = vld [vmem:[%s2] sm:$0x1]
  %vm18 = vcmask 523264
  %v19 = vsel %vm18, %v14, 0.0
  %20 = vadd.xlane.f32.xlu0 %v19
  %v21 = vpop.xlane.xlu0 %20
  %v22 = vsel %vm18, %v15, 0.0
  %23 = vadd.xlane.f32.xlu0 %v22
  %v24 = vpop.xlane.xlu0 %23
  %v25 = vrcp.pop 64.0
  %v26 = vmul.f32 %v21, %v25
  %v27 = vmul.f32 %v24, %v25
  %v28 = vsub.f32 %v14, %v26
  %v29 = vsub.f32 %v15, %v27
  %v30 = vmul.f32 %v28, %v28
  %v31 = vmul.f32 %v29, %v29
  %v32 = vsel %vm18, %v30, 0.0
  %33 = vadd.xlane.f32.xlu0 %v32
  %v34 = vpop.xlane.xlu0 %33
  %v35 = vsel %vm18, %v31, 0.0
  %36 = vadd.xlane.f32.xlu0 %v35
  %v37 = vpop.xlane.xlu0 %36
  %v38 = vmul.f32 %v34, %v25
  %v39 = vmul.f32 %v37, %v25
  %v40 = vadd.f32 %v38, 1e-05
  %v41 = vadd.f32 %v39, 1e-05
  %v42 = vrsqrt.pop %v40
  %v43 = vrsqrt.pop %v41
  %v44 = vmul.f32 %v28, %v42
  %v45 = vmul.f32 %v29, %v43
  %v47 = vlaneseq
  %v48 = vshrl.u32 %v47, 7
  %v49 = vsub.s32 0, %v48
  %v50 = vrot.slane %v16, %v49
  %v52 = vmul.f32 %v44, %v50
  %v53 = vmul.f32 %v45, %v50
  %v55 = vlaneseq
  %v56 = vshrl.u32 %v55, 7
  %v57 = vsub.s32 0, %v56
  %v58 = vrot.slane %v17, %v57
  %v60 = vadd.f32 %v52, %v58
  %v61 = vadd.f32 %v53, %v58
  %62 = vst.msk [vmem:[%s3] sm:$0xff] %vm18, %v60
  %63 = vst.msk [vmem:[%s3 + $0x8] sm:$0xff] %vm18, %v61
  // Predicated region
  $region14: #{forward_glue.4} parent=0 // pred_check
    _
  $region15: #{forward_glue.4} parent=0 // pred_check_branch
    %65 = sbr.rel (0) target = $region17
  $region16: #{forward_glue.4} parent=0 // pred_region
    _
  $region17: #{forward_glue.4} parent=0 // pred_fallthru
    _
  // Predicated region
  $region18: #{forward_glue.4} parent=0 // pred_check
    _
  $region19: #{forward_glue.4} parent=0 // pred_check_branch
    %67 = sbr.rel (0) target = $region21
  $region20: #{forward_glue.4} parent=0 // pred_region
    _
  $region21: #{forward_glue.4} parent=0 // pred_fallthru
    _

// kernel: forward_glue.7
$region0: #{forward_glue.7}
  #allocation0 [shape = 'u32[]', space=smem, size = 0x4, offset = 0x4, fixed_abs, tag = 'smem constant byte address 0x4 - core index']
  #allocation1 [shape = 'u32[144,128]{1,0:T(1,128)}', space=vmem, size = 0x12000, scoped, tag = 'internal scratch']
  %s0 = inlined_call_operand.vmem [shape: f32[2,64], index: 0, kind: input, shape index: {}]
  %s1 = inlined_call_operand.vmem [shape: f32[1,64], index: 1, kind: input, shape index: {}]
  %s2 = inlined_call_operand.vmem [shape: f32[1,64], index: 2, kind: input, shape index: {}]
  %s3 = inlined_call_operand.vmem [shape: bf16[64,2], index: 3, kind: input, shape index: {}]
  %s4 = inlined_call_operand.vmem [shape: f32[1,2], index: 4, kind: input, shape index: {}]
  %s5 = inlined_call_operand.hbm [shape: f32[2,2], index: 5, kind: output, shape index: {}]
  %s6 = sld [smem:[#allocation0]]
  $region30: #{forward_glue.7} parent=0
    _
  %s8 = ssub.s32 1, %s6
  %s9 = scalar_select 0, %s8, %s6
  $region1: #{forward_glue.7} parent=0
    #allocation2 [shape = 'u8[1024]{0}', space=vmem, size = 0x400, scoped, tag = 'output window, operand 0, single buffered']
    #allocation3 [shape = 's32[1]{0}', space=sflag, size = 0x4, scoped, tag = 'scoped memory for forward_glue.7']
    %10 = vsyncpa [#allocation3], 0
    // Predicated region
    $region2: #{forward_glue.7} parent=1 // pred_check
      _
    $region3: #{forward_glue.7} parent=1 // pred_check_branch
      %12 = sbr.rel (0) target = $region5
    $region4: #{forward_glue.7} parent=1 // pred_region
      _
    $region5: #{forward_glue.7} parent=1 // pred_fallthru
      _
    // Predicated region
    $region6: #{forward_glue.7} parent=1 // pred_check
      _
    $region7: #{forward_glue.7} parent=1 // pred_check_branch
      %14 = sbr.rel (0) target = $region9
    $region8: #{forward_glue.7} parent=1 // pred_region
      _
    $region9: #{forward_glue.7} parent=1 // pred_fallthru
      _
    // Predicated region
    $region10: #{forward_glue.7} parent=1 // pred_check
      _
    $region11: #{forward_glue.7} parent=1 // pred_check_branch
      %16 = sbr.rel (0) target = $region13
    $region12: #{forward_glue.7} parent=1 // pred_region
      _
    $region13: #{forward_glue.7} parent=1 // pred_fallthru
      _
    // Predicated region
    $region14: #{forward_glue.7} parent=1 // pred_check
      _
    $region15: #{forward_glue.7} parent=1 // pred_check_branch
      %18 = sbr.rel (0) target = $region17
    $region16: #{forward_glue.7} parent=1 // pred_region
      _
    $region17: #{forward_glue.7} parent=1 // pred_fallthru
      _
    // Predicated region
    $region18: #{forward_glue.7} parent=1 // pred_check
      _
    $region19: #{forward_glue.7} parent=1 // pred_check_branch
      %20 = sbr.rel (0) target = $region21
    $region20: #{forward_glue.7} parent=1 // pred_region
      _
    $region21: #{forward_glue.7} parent=1 // pred_fallthru
      _
    %v22 = vld [vmem:[%s0] sm:$0x3]
    %v23 = vld [vmem:[%s1] sm:$0x1]
    %v24 = vld [vmem:[%s2] sm:$0x1]
    %vm25 = vcmask 517120
    %v26 = vsel %vm25, %v22, 0.0
    %27 = vadd.xlane.f32.xlu0 %v26
    %v28 = vpop.xlane.xlu0 %27
    %v29 = vrcp.pop 64.0
    %v30 = vmul.f32 %v28, %v29
    %v31 = vsub.f32 %v22, %v30
    %v32 = vmul.f32 %v31, %v31
    %v33 = vsel %vm25, %v32, 0.0
    %34 = vadd.xlane.f32.xlu0 %v33
    %v35 = vpop.xlane.xlu0 %34
    %v36 = vmul.f32 %v35, %v29
    %v37 = vadd.f32 %v36, 1e-05
    %v38 = vrsqrt.pop %v37
    %v39 = vmul.f32 %v31, %v38
    %v41 = vlaneseq
    %v42 = vshrl.u32 %v41, 7
    %v43 = vsub.s32 0, %v42
    %v44 = vrot.slane %v23, %v43
    %v46 = vmul.f32 %v39, %v44
    %v48 = vlaneseq
    %v49 = vshrl.u32 %v48, 7
    %v50 = vsub.s32 0, %v49
    %v51 = vrot.slane %v24, %v50
    %v53 = vadd.f32 %v46, %v51
    %v54 = vpack.c.bf16 %v53, %v53
    %v55 = vld [vmem:[%s3] sm:$0xf]
    %v56 = vld [vmem:[%s3 + $0x4] sm:$0xf]
    %v57 = vld [vmem:[%s3 + $0x8] sm:$0xf]
    %v58 = vld [vmem:[%s3 + $0xc] sm:$0xf]
    %v59 = vld [vmem:[%s3 + $0x10] sm:$0xf]
    %v60 = vld [vmem:[%s3 + $0x14] sm:$0xf]
    %v61 = vld [vmem:[%s3 + $0x18] sm:$0xf]
    %v62 = vld [vmem:[%s3 + $0x1c] sm:$0xf]
    %v63 = vld [vmem:[%s4] sm:$0x1]
    %v65 = vlaneseq
    %v66 = vshrl.u32 %v65, 7
    %v67 = vsub.s32 0, %v66
    %v68 = vrot.slane %v63, %v67
    %v78 = vunpack.c.l.b16 %v55
    %v79 = vunpack.c.l.b16 %v56
    %v80 = vunpack.c.l.b16 %v57
    %v81 = vunpack.c.l.b16 %v58
    %v82 = vunpack.c.l.b16 %v59
    %v83 = vunpack.c.l.b16 %v60
    %v84 = vunpack.c.l.b16 %v61
    %v85 = vunpack.c.l.b16 %v62
    %v86 = vpack.c.b16 %v79, %v78
    %v87 = vpack.c.b16 %v81, %v80
    %v88 = vpack.c.b16 %v83, %v82
    %v89 = vpack.c.b16 %v85, %v84
    %vm94 = vcmask 523264
    %v96 = vsel %vm94, %v54, 0
    %98 = vmatprep.subr.bf16.mxu0 0
    %99 = vmatpush1.bf16.msra.mxu0 %v86
    %100 = vmatprep.subr.bf16.mxu0 0
    %101 = vmatpush1.bf16.msra.mxu0 %v87
    %102 = vmatprep.subr.bf16.mxu0 0
    %103 = vmatpush1.bf16.msra.mxu0 %v88
    %104 = vmatprep.subr.bf16.mxu0 0
    %105 = vmatpush1.bf16.msra.mxu0 %v89
    %106 = vmatprep.subr.bf16.mxu0 0
    %107 = vmatpush1.bf16.msra.mxu0 0
    %108 = vmatprep.subr.bf16.mxu0 0
    %109 = vmatpush1.bf16.msra.mxu0 0
    %110 = vmatprep.subr.bf16.mxu0 0
    %111 = vmatpush1.bf16.msra.mxu0 0
    %112 = vmatprep.subr.bf16.mxu0 0
    %113 = vmatpush1.bf16.msra.mxu0 0
    %114 = vmatprep.subr.bf16.mxu0 0
    %115 = vmatpush1.bf16.msra.mxu0 0
    %116 = vmatprep.subr.bf16.mxu0 0
    %117 = vmatpush1.bf16.msra.mxu0 0
    %118 = vmatprep.subr.bf16.mxu0 0
    %119 = vmatpush1.bf16.msra.mxu0 0
    %120 = vmatprep.subr.bf16.mxu0 0
    %121 = vmatpush1.bf16.msra.mxu0 0
    %122 = vmatprep.subr.bf16.mxu0 0
    %123 = vmatpush1.bf16.msra.mxu0 0
    %124 = vmatprep.subr.bf16.mxu0 0
    %125 = vmatpush1.bf16.msra.mxu0 0
    %126 = vmatprep.subr.bf16.mxu0 0
    %127 = vmatpush1.bf16.msra.mxu0 0
    %128 = vmatprep.subr.bf16.mxu0 0
    %129 = vmatpush1.bf16.msra.mxu0 0
    %130 = vmatprep.mubr.bf16.mxu0 0
    %131 = vmatmul.mubr.bf16.gmra.mrb[0].mxu0 %v96
    %v132 = vpop.f32.mrb[0].mxu0
    %v133 = vadd.f32 %v68, %v132
    %v134 = vpop.f32.mrb[0].mxu0
    %v135 = vpop.f32.mrb[0].mxu0
    %v136 = vpop.f32.mrb[0].mxu0
    %137 = vdwg.mxu0
    %vm138 = vcmask 9216
    %139 = vst.msk [vmem:[#allocation2] sm:$0x3] %vm138, %v133
    // Predicated region
    $region22: #{forward_glue.7} parent=1 // pred_check
      _
    $region23: #{forward_glue.7} parent=1 // pred_check_branch
      %141 = sbr.rel (0) target = $region25
    $region24: #{forward_glue.7} parent=1 // pred_region
      %s143 = ssub.s32 32, 32
      %144 = vsyncadd [#allocation3], %s143
      %s146 = sshll.u32 [#allocation2], 4
      %s147 = int_to_ptr.vmem [resolvable:$true] %s146
      %149 = dma.vmem_to_hbm [thread:$0]  %s147, 32, %s5, [#allocation3]
    $region25: #{forward_glue.7} parent=1 // pred_fallthru
      _
    // Predicated region
    $region26: #{forward_glue.7} parent=1 // pred_check
      _
    $region27: #{forward_glue.7} parent=1 // pred_check_branch
      %151 = sbr.rel (0) target = $region29
    $region28: #{forward_glue.7} parent=1 // pred_region
      %152 = dma.done [#allocation3], 32
    $region29: #{forward_glue.7} parent=1 // pred_fallthru
      _
    %153 = vsyncpa [#allocation3], 1

// kernel: forward_glue.5
$region0: #{forward_glue.5}
  #allocation0 [shape = 'u32[]', space=smem, size = 0x4, offset = 0x4, fixed_abs, tag = 'smem constant byte address 0x4 - core index']
  #allocation1 [shape = 'u32[144,128]{1,0:T(1,128)}', space=vmem, size = 0x12000, scoped, tag = 'internal scratch']
  %s0 = inlined_call_operand.vmem [shape: f32[2,8,64], index: 0, kind: input, shape index: {}]
  %s1 = inlined_call_operand.vmem [shape: f32[2,1,8], index: 1, kind: input, shape index: {}]
  %s2 = inlined_call_operand.vmem [shape: bf16[64,192], index: 2, kind: input, shape index: {}]
  %s3 = inlined_call_operand.vmem [shape: f32[1,192], index: 3, kind: input, shape index: {}]
  %s4 = inlined_call_operand.vmem [shape: bf16[64,16], index: 4, kind: input, shape index: {}]
  %s5 = inlined_call_operand.vmem [shape: bf16[16,128], index: 5, kind: input, shape index: {}]
  %s6 = inlined_call_operand.vmem [shape: bf16[64,64], index: 6, kind: input, shape index: {}]
  %s7 = inlined_call_operand.vmem [shape: f32[1,64], index: 7, kind: input, shape index: {}]
  %s8 = inlined_call_operand.vmem [shape: f32[1,64], index: 8, kind: input, shape index: {}]
  %s9 = inlined_call_operand.vmem [shape: f32[1,64], index: 9, kind: input, shape index: {}]
  %s10 = inlined_call_operand.vmem [shape: bf16[64,128], index: 10, kind: input, shape index: {}]
  %s11 = inlined_call_operand.vmem [shape: f32[1,128], index: 11, kind: input, shape index: {}]
  %s12 = inlined_call_operand.vmem [shape: bf16[128,64], index: 12, kind: input, shape index: {}]
  %s13 = inlined_call_operand.vmem [shape: f32[1,64], index: 13, kind: input, shape index: {}]
  %s14 = inlined_call_operand.vmem [shape: f32[1,64], index: 14, kind: input, shape index: {}]
  %s15 = inlined_call_operand.vmem [shape: f32[1,64], index: 15, kind: input, shape index: {}]
  %s16 = inlined_call_operand.vmem [shape: f32[2,8,64], index: 16, kind: output, shape index: {}]
  %s17 = sld [smem:[#allocation0]]
  $region97: #{forward_glue.5} parent=0
    _
  %s19 = ssub.s32 1, %s17
  %s20 = scalar_select 0, %s19, %s17
  loop: start=0, step=1, limit=4
  $region2: #{forward_glue.5} parent=0 // loop_pre_header
    _
  $region3: #{forward_glue.5} parent=0 // loop_header
    %s22 = sphi 0, %s26
    %p23 = scmp.ge.s32.totalorder %s22, 4
    %s32 = sphi 0, %s34
    %s35 = sphi 0, %s32
    %s36 = sphi 0, %s35
    %s52 = sphi 0, %s36
    %s58 = sphi 0, %s60
    %s61 = sphi 0, %s58
    %s62 = sphi 0, %s61
    %s78 = sphi 0, %s62
    %s82 = sphi 0, %s82
    %s84 = sphi 0, %s82
    %s85 = sphi 0, %s84
    %s99 = sphi 0, %s85
    %s103 = sphi 0, %s103
    %s105 = sphi 0, %s103
    %s106 = sphi 0, %s105
    %s120 = sphi 0, %s106
    %s124 = sphi 0, %s124
    %s126 = sphi 0, %s124
    %s127 = sphi 0, %s126
    %s141 = sphi 0, %s127
    %s145 = sphi 0, %s145
    %s147 = sphi 0, %s145
    %s148 = sphi 0, %s147
    %s162 = sphi 0, %s148
    %s166 = sphi 0, %s166
    %s168 = sphi 0, %s166
    %s169 = sphi 0, %s168
    %s183 = sphi 0, %s169
    %s187 = sphi 0, %s187
    %s189 = sphi 0, %s187
    %s190 = sphi 0, %s189
    %s204 = sphi 0, %s190
    %s208 = sphi 0, %s208
    %s210 = sphi 0, %s208
    %s211 = sphi 0, %s210
    %s225 = sphi 0, %s211
    %s229 = sphi 0, %s229
    %s231 = sphi 0, %s229
    %s232 = sphi 0, %s231
    %s246 = sphi 0, %s232
    %s250 = sphi 0, %s250
    %s252 = sphi 0, %s250
    %s253 = sphi 0, %s252
    %s267 = sphi 0, %s253
    %s271 = sphi 0, %s271
    %s273 = sphi 0, %s271
    %s274 = sphi 0, %s273
    %s288 = sphi 0, %s274
    %s292 = sphi 0, %s292
    %s294 = sphi 0, %s292
    %s295 = sphi 0, %s294
    %s309 = sphi 0, %s295
    %s313 = sphi 0, %s313
    %s315 = sphi 0, %s313
    %s316 = sphi 0, %s315
    %s330 = sphi 0, %s316
    %s334 = sphi 0, %s334
    %s336 = sphi 0, %s334
    %s337 = sphi 0, %s336
    %s351 = sphi 0, %s337
    %s355 = sphi 0, %s355
    %s357 = sphi 0, %s355
    %s358 = sphi 0, %s357
    %s372 = sphi 0, %s358
    %s378 = sphi 0, %s380
    %s381 = sphi 0, %s378
    %s382 = sphi 0, %s381
    %s398 = sphi 0, %s382
  $region4: #{forward_glue.5} parent=0 // loop_header_branch
    %25 = sbr.rel (%p23) target = $region8
  $region5: #{forward_glue.5} parent=0 // loop_body
    %s27 = ssub.s32 %s22, 1
    %s28 = ssub.s32 %s22, 2
    %s29 = sadd.s32 %s22, 1
    %s30 = ssub.s32 %s22, %s29
    %p31 = scmp.eq.s32.totalorder %s30, 0
    %s33 = sadd.s32 %s32, 1
    %s34 = scalar_select %p31, %s32, %s33
    %p37 = pneg %p31
    %p38 = scmp.eq.s32.totalorder %s22, 1
    %p39 = por %p37, %p38
    %p40 = scmp.ne.s32.totalorder %s32, %s35
    %p41 = scmp.eq.s32.totalorder %s22, 0
    %p42 = por %p40, %p41
    %p43 = scmp.ne.s32.totalorder %s32, %s35
    %p44 = scmp.eq.s32.totalorder %s27, 1
    %p45 = por %p43, %p44
    %p46 = scmp.ne.s32.totalorder %s35, %s36
    %p47 = scmp.eq.s32.totalorder %s27, 0
    %p48 = por %p46, %p47
    %p49 = scmp.ne.s32.totalorder %s35, %s36
    %p50 = scmp.eq.s32.totalorder %s28, 1
    %p51 = por %p49, %p50
    %p53 = scmp.ne.s32.totalorder %s36, %s52
    %p54 = scmp.eq.s32.totalorder %s28, 0
    %p55 = por %p53, %p54
    %s56 = ssub.s32 %s22, %s29
    %p57 = scmp.eq.s32.totalorder %s56, 0
    %s59 = sadd.s32 %s58, 1
    %s60 = scalar_select %p57, %s58, %s59
    %p63 = pneg %p57
    %p64 = scmp.eq.s32.totalorder %s22, 1
    %p65 = por %p63, %p64
    %p66 = scmp.ne.s32.totalorder %s58, %s61
    %p67 = scmp.eq.s32.totalorder %s22, 0
    %p68 = por %p66, %p67
    %p69 = scmp.ne.s32.totalorder %s58, %s61
    %p70 = scmp.eq.s32.totalorder %s27, 1
    %p71 = por %p69, %p70
    %p72 = scmp.ne.s32.totalorder %s61, %s62
    %p73 = scmp.eq.s32.totalorder %s27, 0
    %p74 = por %p72, %p73
    %p75 = scmp.ne.s32.totalorder %s61, %s62
    %p76 = scmp.eq.s32.totalorder %s28, 1
    %p77 = por %p75, %p76
    %p79 = scmp.ne.s32.totalorder %s62, %s78
    %p80 = scmp.eq.s32.totalorder %s28, 0
    %p81 = por %p79, %p80
    %s83 = sadd.s32 %s82, 1
    %p86 = scmp.eq.s32.totalorder %s22, 1
    %p87 = scmp.ne.s32.totalorder %s82, %s84
    %p88 = scmp.eq.s32.totalorder %s22, 0
    %p89 = por %p87, %p88
    %p90 = scmp.ne.s32.totalorder %s82, %s84
    %p91 = scmp.eq.s32.totalorder %s27, 1
    %p92 = por %p90, %p91
    %p93 = scmp.ne.s32.totalorder %s84, %s85
    %p94 = scmp.eq.s32.totalorder %s27, 0
    %p95 = por %p93, %p94
    %p96 = scmp.ne.s32.totalorder %s84, %s85
    %p97 = scmp.eq.s32.totalorder %s28, 1
    %p98 = por %p96, %p97
    %p100 = scmp.ne.s32.totalorder %s85, %s99
    %p101 = scmp.eq.s32.totalorder %s28, 0
    %p102 = por %p100, %p101
    %s104 = sadd.s32 %s103, 1
    %p107 = scmp.eq.s32.totalorder %s22, 1
    %p108 = scmp.ne.s32.totalorder %s103, %s105
    %p109 = scmp.eq.s32.totalorder %s22, 0
    %p110 = por %p108, %p109
    %p111 = scmp.ne.s32.totalorder %s103, %s105
    %p112 = scmp.eq.s32.totalorder %s27, 1
    %p113 = por %p111, %p112
    %p114 = scmp.ne.s32.totalorder %s105, %s106
    %p115 = scmp.eq.s32.totalorder %s27, 0
    %p116 = por %p114, %p115
    %p117 = scmp.ne.s32.totalorder %s105, %s106
    %p118 = scmp.eq.s32.totalorder %s28, 1
    %p119 = por %p117, %p118
    %p121 = scmp.ne.s32.totalorder %s106, %s120
    %p122 = scmp.eq.s32.totalorder %s28, 0
    %p123 = por %p121, %p122
    %s125 = sadd.s32 %s124, 1
    %p128 = scmp.eq.s32.totalorder %s22, 1
    %p129 = scmp.ne.s32.totalorder %s124, %s126
    %p130 = scmp.eq.s32.totalorder %s22, 0
    %p131 = por %p129, %p130
    %p132 = scmp.ne.s32.totalorder %s124, %s126
    %p133 = scmp.eq.s32.totalorder %s27, 1
    %p134 = por %p132, %p133
    %p135 = scmp.ne.s32.totalorder %s126, %s127
    %p136 = scmp.eq.s32.totalorder %s27, 0
    %p137 = por %p135, %p136
    %p138 = scmp.ne.s32.totalorder %s126, %s127
    %p139 = scmp.eq.s32.totalorder %s28, 1
    %p140 = por %p138, %p139
    %p142 = scmp.ne.s32.totalorder %s127, %s141
    %p143 = scmp.eq.s32.totalorder %s28, 0
    %p144 = por %p142, %p143
    %s146 = sadd.s32 %s145, 1
    %p149 = scmp.eq.s32.totalorder %s22, 1
    %p150 = scmp.ne.s32.totalorder %s145, %s147
    %p151 = scmp.eq.s32.totalorder %s22, 0
    %p152 = por %p150, %p151
    %p153 = scmp.ne.s32.totalorder %s145, %s147
    %p154 = scmp.eq.s32.totalorder %s27, 1
    %p155 = por %p153, %p154
    %p156 = scmp.ne.s32.totalorder %s147, %s148
    %p157 = scmp.eq.s32.totalorder %s27, 0
    %p158 = por %p156, %p157
    %p159 = scmp.ne.s32.totalorder %s147, %s148
    %p160 = scmp.eq.s32.totalorder %s28, 1
    %p161 = por %p159, %p160
    %p163 = scmp.ne.s32.totalorder %s148, %s162
    %p164 = scmp.eq.s32.totalorder %s28, 0
    %p165 = por %p163, %p164
    %s167 = sadd.s32 %s166, 1
    %p170 = scmp.eq.s32.totalorder %s22, 1
    %p171 = scmp.ne.s32.totalorder %s166, %s168
    %p172 = scmp.eq.s32.totalorder %s22, 0
    %p173 = por %p171, %p172
    %p174 = scmp.ne.s32.totalorder %s166, %s168
    %p175 = scmp.eq.s32.totalorder %s27, 1
    %p176 = por %p174, %p175
    %p177 = scmp.ne.s32.totalorder %s168, %s169
    %p178 = scmp.eq.s32.totalorder %s27, 0
    %p179 = por %p177, %p178
    %p180 = scmp.ne.s32.totalorder %s168, %s169
    %p181 = scmp.eq.s32.totalorder %s28, 1
    %p182 = por %p180, %p181
    %p184 = scmp.ne.s32.totalorder %s169, %s183
    %p185 = scmp.eq.s32.totalorder %s28, 0
    %p186 = por %p184, %p185
    %s188 = sadd.s32 %s187, 1
    %p191 = scmp.eq.s32.totalorder %s22, 1
    %p192 = scmp.ne.s32.totalorder %s187, %s189
    %p193 = scmp.eq.s32.totalorder %s22, 0
    %p194 = por %p192, %p193
    %p195 = scmp.ne.s32.totalorder %s187, %s189
    %p196 = scmp.eq.s32.totalorder %s27, 1
    %p197 = por %p195, %p196
    %p198 = scmp.ne.s32.totalorder %s189, %s190
    %p199 = scmp.eq.s32.totalorder %s27, 0
    %p200 = por %p198, %p199
    %p201 = scmp.ne.s32.totalorder %s189, %s190
    %p202 = scmp.eq.s32.totalorder %s28, 1
    %p203 = por %p201, %p202
    %p205 = scmp.ne.s32.totalorder %s190, %s204
    %p206 = scmp.eq.s32.totalorder %s28, 0
    %p207 = por %p205, %p206
    %s209 = sadd.s32 %s208, 1
    %p212 = scmp.eq.s32.totalorder %s22, 1
    %p213 = scmp.ne.s32.totalorder %s208, %s210
    %p214 = scmp.eq.s32.totalorder %s22, 0
    %p215 = por %p213, %p214
    %p216 = scmp.ne.s32.totalorder %s208, %s210
    %p217 = scmp.eq.s32.totalorder %s27, 1
    %p218 = por %p216, %p217
    %p219 = scmp.ne.s32.totalorder %s210, %s211
    %p220 = scmp.eq.s32.totalorder %s27, 0
    %p221 = por %p219, %p220
    %p222 = scmp.ne.s32.totalorder %s210, %s211
    %p223 = scmp.eq.s32.totalorder %s28, 1
    %p224 = por %p222, %p223
    %p226 = scmp.ne.s32.totalorder %s211, %s225
    %p227 = scmp.eq.s32.totalorder %s28, 0
    %p228 = por %p226, %p227
    %s230 = sadd.s32 %s229, 1
    %p233 = scmp.eq.s32.totalorder %s22, 1
    %p234 = scmp.ne.s32.totalorder %s229, %s231
    %p235 = scmp.eq.s32.totalorder %s22, 0
    %p236 = por %p234, %p235
    %p237 = scmp.ne.s32.totalorder %s229, %s231
    %p238 = scmp.eq.s32.totalorder %s27, 1
    %p239 = por %p237, %p238
    %p240 = scmp.ne.s32.totalorder %s231, %s232
    %p241 = scmp.eq.s32.totalorder %s27, 0
    %p242 = por %p240, %p241
    %p243 = scmp.ne.s32.totalorder %s231, %s232
    %p244 = scmp.eq.s32.totalorder %s28, 1
    %p245 = por %p243, %p244
    %p247 = scmp.ne.s32.totalorder %s232, %s246
    %p248 = scmp.eq.s32.totalorder %s28, 0
    %p249 = por %p247, %p248
    %s251 = sadd.s32 %s250, 1
    %p254 = scmp.eq.s32.totalorder %s22, 1
    %p255 = scmp.ne.s32.totalorder %s250, %s252
    %p256 = scmp.eq.s32.totalorder %s22, 0
    %p257 = por %p255, %p256
    %p258 = scmp.ne.s32.totalorder %s250, %s252
    %p259 = scmp.eq.s32.totalorder %s27, 1
    %p260 = por %p258, %p259
    %p261 = scmp.ne.s32.totalorder %s252, %s253
    %p262 = scmp.eq.s32.totalorder %s27, 0
    %p263 = por %p261, %p262
    %p264 = scmp.ne.s32.totalorder %s252, %s253
    %p265 = scmp.eq.s32.totalorder %s28, 1
    %p266 = por %p264, %p265
    %p268 = scmp.ne.s32.totalorder %s253, %s267
    %p269 = scmp.eq.s32.totalorder %s28, 0
    %p270 = por %p268, %p269
    %s272 = sadd.s32 %s271, 1
    %p275 = scmp.eq.s32.totalorder %s22, 1
    %p276 = scmp.ne.s32.totalorder %s271, %s273
    %p277 = scmp.eq.s32.totalorder %s22, 0
    %p278 = por %p276, %p277
    %p279 = scmp.ne.s32.totalorder %s271, %s273
    %p280 = scmp.eq.s32.totalorder %s27, 1
    %p281 = por %p279, %p280
    %p282 = scmp.ne.s32.totalorder %s273, %s274
    %p283 = scmp.eq.s32.totalorder %s27, 0
    %p284 = por %p282, %p283
    %p285 = scmp.ne.s32.totalorder %s273, %s274
    %p286 = scmp.eq.s32.totalorder %s28, 1
    %p287 = por %p285, %p286
    %p289 = scmp.ne.s32.totalorder %s274, %s288
    %p290 = scmp.eq.s32.totalorder %s28, 0
    %p291 = por %p289, %p290
    %s293 = sadd.s32 %s292, 1
    %p296 = scmp.eq.s32.totalorder %s22, 1
    %p297 = scmp.ne.s32.totalorder %s292, %s294
    %p298 = scmp.eq.s32.totalorder %s22, 0
    %p299 = por %p297, %p298
    %p300 = scmp.ne.s32.totalorder %s292, %s294
    %p301 = scmp.eq.s32.totalorder %s27, 1
    %p302 = por %p300, %p301
    %p303 = scmp.ne.s32.totalorder %s294, %s295
    %p304 = scmp.eq.s32.totalorder %s27, 0
    %p305 = por %p303, %p304
    %p306 = scmp.ne.s32.totalorder %s294, %s295
    %p307 = scmp.eq.s32.totalorder %s28, 1
    %p308 = por %p306, %p307
    %p310 = scmp.ne.s32.totalorder %s295, %s309
    %p311 = scmp.eq.s32.totalorder %s28, 0
    %p312 = por %p310, %p311
    %s314 = sadd.s32 %s313, 1
    %p317 = scmp.eq.s32.totalorder %s22, 1
    %p318 = scmp.ne.s32.totalorder %s313, %s315
    %p319 = scmp.eq.s32.totalorder %s22, 0
    %p320 = por %p318, %p319
    %p321 = scmp.ne.s32.totalorder %s313, %s315
    %p322 = scmp.eq.s32.totalorder %s27, 1
    %p323 = por %p321, %p322
    %p324 = scmp.ne.s32.totalorder %s315, %s316
    %p325 = scmp.eq.s32.totalorder %s27, 0
    %p326 = por %p324, %p325
    %p327 = scmp.ne.s32.totalorder %s315, %s316
    %p328 = scmp.eq.s32.totalorder %s28, 1
    %p329 = por %p327, %p328
    %p331 = scmp.ne.s32.totalorder %s316, %s330
    %p332 = scmp.eq.s32.totalorder %s28, 0
    %p333 = por %p331, %p332
    %s335 = sadd.s32 %s334, 1
    %p338 = scmp.eq.s32.totalorder %s22, 1
    %p339 = scmp.ne.s32.totalorder %s334, %s336
    %p340 = scmp.eq.s32.totalorder %s22, 0
    %p341 = por %p339, %p340
    %p342 = scmp.ne.s32.totalorder %s334, %s336
    %p343 = scmp.eq.s32.totalorder %s27, 1
    %p344 = por %p342, %p343
    %p345 = scmp.ne.s32.totalorder %s336, %s337
    %p346 = scmp.eq.s32.totalorder %s27, 0
    %p347 = por %p345, %p346
    %p348 = scmp.ne.s32.totalorder %s336, %s337
    %p349 = scmp.eq.s32.totalorder %s28, 1
    %p350 = por %p348, %p349
    %p352 = scmp.ne.s32.totalorder %s337, %s351
    %p353 = scmp.eq.s32.totalorder %s28, 0
    %p354 = por %p352, %p353
    %s356 = sadd.s32 %s355, 1
    %p359 = scmp.eq.s32.totalorder %s22, 1
    %p360 = scmp.ne.s32.totalorder %s355, %s357
    %p361 = scmp.eq.s32.totalorder %s22, 0
    %p362 = por %p360, %p361
    %p363 = scmp.ne.s32.totalorder %s355, %s357
    %p364 = scmp.eq.s32.totalorder %s27, 1
    %p365 = por %p363, %p364
    %p366 = scmp.ne.s32.totalorder %s357, %s358
    %p367 = scmp.eq.s32.totalorder %s27, 0
    %p368 = por %p366, %p367
    %p369 = scmp.ne.s32.totalorder %s357, %s358
    %p370 = scmp.eq.s32.totalorder %s28, 1
    %p371 = por %p369, %p370
    %p373 = scmp.ne.s32.totalorder %s358, %s372
    %p374 = scmp.eq.s32.totalorder %s28, 0
    %p375 = por %p373, %p374
    %s376 = ssub.s32 %s22, %s29
    %p377 = scmp.eq.s32.totalorder %s376, 0
    %s379 = sadd.s32 %s378, 1
    %s380 = scalar_select %p377, %s378, %s379
    %p383 = pneg %p377
    %p384 = scmp.eq.s32.totalorder %s22, 1
    %p385 = por %p383, %p384
    %p386 = scmp.ne.s32.totalorder %s378, %s381
    %p387 = scmp.eq.s32.totalorder %s22, 0
    %p388 = por %p386, %p387
    %p389 = scmp.ne.s32.totalorder %s378, %s381
    %p390 = scmp.eq.s32.totalorder %s27, 1
    %p391 = por %p389, %p390
    %p392 = scmp.ne.s32.totalorder %s381, %s382
    %p393 = scmp.eq.s32.totalorder %s27, 0
    %p394 = por %p392, %p393
    %p395 = scmp.ne.s32.totalorder %s381, %s382
    %p396 = scmp.eq.s32.totalorder %s28, 1
    %p397 = por %p395, %p396
    %p399 = scmp.ne.s32.totalorder %s382, %s398
    %p400 = scmp.eq.s32.totalorder %s28, 0
    %p401 = por %p399, %p400
    %p402 = scmp.le.s32.totalorder 1, %s22
    %p403 = scmp.lt.s32.totalorder %s22, 3
    %p404 = pnand %p402, %p403
    %p405 = pneg %p404
    // Predicated region
    $region9: #{forward_glue.5} parent=5 // pred_check
      _
    $region10: #{forward_glue.5} parent=5 // pred_check_branch
      %407 = sbr.rel (%p404) target = $region12
    $region11: #{forward_glue.5} parent=5 // pred_region
      %s408 = ssub.s32 %s22, 1
      // Predicated region
      $region13: #{forward_glue.5} parent=11 // pred_check
        %p409 = pneg %p95
      $region14: #{forward_glue.5} parent=11 // pred_check_branch
        %411 = sbr.rel (%p409) target = $region16
      $region15: #{forward_glue.5} parent=11 // pred_region
        _
      $region16: #{forward_glue.5} parent=11 // pred_fallthru
        _
      // Predicated region
      $region17: #{forward_glue.5} parent=11 // pred_check
        %p412 = pneg %p116
      $region18: #{forward_glue.5} parent=11 // pred_check_branch
        %414 = sbr.rel (%p412) target = $region20
      $region19: #{forward_glue.5} parent=11 // pred_region
        _
      $region20: #{forward_glue.5} parent=11 // pred_fallthru
        _
      // Predicated region
      $region21: #{forward_glue.5} parent=11 // pred_check
        %p415 = pneg %p137
      $region22: #{forward_glue.5} parent=11 // pred_check_branch
        %417 = sbr.rel (%p415) target = $region24
      $region23: #{forward_glue.5} parent=11 // pred_region
        _
      $region24: #{forward_glue.5} parent=11 // pred_fallthru
        _
      // Predicated region
      $region25: #{forward_glue.5} parent=11 // pred_check
        %p418 = pneg %p158
      $region26: #{forward_glue.5} parent=11 // pred_check_branch
        %420 = sbr.rel (%p418) target = $region28
      $region27: #{forward_glue.5} parent=11 // pred_region
        _
      $region28: #{forward_glue.5} parent=11 // pred_fallthru
        _
      // Predicated region
      $region29: #{forward_glue.5} parent=11 // pred_check
        %p421 = pneg %p179
      $region30: #{forward_glue.5} parent=11 // pred_check_branch
        %423 = sbr.rel (%p421) target = $region32
      $region31: #{forward_glue.5} parent=11 // pred_region
        _
      $region32: #{forward_glue.5} parent=11 // pred_fallthru
        _
      // Predicated region
      $region33: #{forward_glue.5} parent=11 // pred_check
        %p424 = pneg %p200
      $region34: #{forward_glue.5} parent=11 // pred_check_branch
        %426 = sbr.rel (%p424) target = $region36
      $region35: #{forward_glue.5} parent=11 // pred_region
        _
      $region36: #{forward_glue.5} parent=11 // pred_fallthru
        _
      // Predicated region
      $region37: #{forward_glue.5} parent=11 // pred_check
        %p427 = pneg %p221
      $region38: #{forward_glue.5} parent=11 // pred_check_branch
        %429 = sbr.rel (%p427) target = $region40
      $region39: #{forward_glue.5} parent=11 // pred_region
        _
      $region40: #{forward_glue.5} parent=11 // pred_fallthru
        _
      // Predicated region
      $region41: #{forward_glue.5} parent=11 // pred_check
        %p430 = pneg %p242
      $region42: #{forward_glue.5} parent=11 // pred_check_branch
        %432 = sbr.rel (%p430) target = $region44
      $region43: #{forward_glue.5} parent=11 // pred_region
        _
      $region44: #{forward_glue.5} parent=11 // pred_fallthru
        _
      // Predicated region
      $region45: #{forward_glue.5} parent=11 // pred_check
        %p433 = pneg %p263
      $region46: #{forward_glue.5} parent=11 // pred_check_branch
        %435 = sbr.rel (%p433) target = $region48
      $region47: #{forward_glue.5} parent=11 // pred_region
        _
      $region48: #{forward_glue.5} parent=11 // pred_fallthru
        _
      // Predicated region
      $region49: #{forward_glue.5} parent=11 // pred_check
        %p436 = pneg %p284
      $region50: #{forward_glue.5} parent=11 // pred_check_branch
        %438 = sbr.rel (%p436) target = $region52
      $region51: #{forward_glue.5} parent=11 // pred_region
        _
      $region52: #{forward_glue.5} parent=11 // pred_fallthru
        _
      // Predicated region
      $region53: #{forward_glue.5} parent=11 // pred_check
        %p439 = pneg %p305
      $region54: #{forward_glue.5} parent=11 // pred_check_branch
        %441 = sbr.rel (%p439) target = $region56
      $region55: #{forward_glue.5} parent=11 // pred_region
        _
      $region56: #{forward_glue.5} parent=11 // pred_fallthru
        _
      // Predicated region
      $region57: #{forward_glue.5} parent=11 // pred_check
        %p442 = pneg %p326
      $region58: #{forward_glue.5} parent=11 // pred_check_branch
        %444 = sbr.rel (%p442) target = $region60
      $region59: #{forward_glue.5} parent=11 // pred_region
        _
      $region60: #{forward_glue.5} parent=11 // pred_fallthru
        _
      // Predicated region
      $region61: #{forward_glue.5} parent=11 // pred_check
        %p445 = pneg %p347
      $region62: #{forward_glue.5} parent=11 // pred_check_branch
        %447 = sbr.rel (%p445) target = $region64
      $region63: #{forward_glue.5} parent=11 // pred_region
        _
      $region64: #{forward_glue.5} parent=11 // pred_fallthru
        _
      // Predicated region
      $region65: #{forward_glue.5} parent=11 // pred_check
        %p448 = pneg %p368
      $region66: #{forward_glue.5} parent=11 // pred_check_branch
        %450 = sbr.rel (%p448) target = $region68
      $region67: #{forward_glue.5} parent=11 // pred_region
        _
      $region68: #{forward_glue.5} parent=11 // pred_fallthru
        _
    $region12: #{forward_glue.5} parent=5 // pred_fallthru
      _
    %p451 = scmp.lt.s32.totalorder %s22, 2
    // Predicated region
    $region69: #{forward_glue.5} parent=5 // pred_check
      %p452 = pneg %p451
    $region70: #{forward_glue.5} parent=5 // pred_check_branch
      %454 = sbr.rel (%p452) target = $region72
    $region71: #{forward_glue.5} parent=5 // pred_region
      // Predicated region
      $region73: #{forward_glue.5} parent=71 // pred_check
        %p455 = pneg %p42
      $region74: #{forward_glue.5} parent=71 // pred_check_branch
        %457 = sbr.rel (%p455) target = $region76
      $region75: #{forward_glue.5} parent=71 // pred_region
        %p458 = scmp.lt.s32.totalorder %s22, 1
        %s459 = scalar_select %p458, %s22, 1
        %s460 = smul.addr %s459, 8
        %s461 = scalar_lea.vmem %s0, %s460
      $region76: #{forward_glue.5} parent=71 // pred_fallthru
        _
      // Predicated region
      $region77: #{forward_glue.5} parent=71 // pred_check
        %p462 = pneg %p68
      $region78: #{forward_glue.5} parent=71 // pred_check_branch
        %464 = sbr.rel (%p462) target = $region80
      $region79: #{forward_glue.5} parent=71 // pred_region
        %p465 = scmp.lt.s32.totalorder %s22, 1
        %s466 = scalar_select %p465, %s22, 1
        %s467 = scalar_lea.vmem %s1, %s466
      $region80: #{forward_glue.5} parent=71 // pred_fallthru
        _
    $region72: #{forward_glue.5} parent=5 // pred_fallthru
      _
    %p468 = scmp.le.s32.totalorder 1, %s22
    %p469 = scmp.lt.s32.totalorder %s22, 3
    %p470 = pnand %p468, %p469
    %p471 = pneg %p470
    // Predicated region
    $region81: #{forward_glue.5} parent=5 // pred_check
      _
    $region82: #{forward_glue.5} parent=5 // pred_check_branch
      %473 = sbr.rel (%p470) target = $region84
    $region83: #{forward_glue.5} parent=5 // pred_region
      %s474 = ssub.s32 %s22, 1
      %p475 = scmp.lt.s32.totalorder %s27, 1
      %s476 = scalar_select %p475, %s27, 1
      %s477 = smul.addr %s476, 8
      %s478 = scalar_lea.vmem %s0, %s477
      %p479 = pneg %p48
      %p480 = pneg %p45
      %p481 = scmp.lt.s32.totalorder %s27, 1
      %s482 = scalar_select %p481, %s27, 1
      %s483 = scalar_lea.vmem %s1, %s482
      %p484 = pneg %p74
      %p485 = pneg %p71
      %p486 = pneg %p95
      %p487 = pneg %p92
      %p488 = pneg %p116
      %p489 = pneg %p113
      %p490 = pneg %p137
      %p491 = pneg %p134
      %p492 = pneg %p158
      %p493 = pneg %p155
      %p494 = pneg %p179
      %p495 = pneg %p176
      %p496 = pneg %p200
      %p497 = pneg %p197
      %p498 = pneg %p221
      %p499 = pneg %p218
      %p500 = pneg %p242
      %p501 = pneg %p239
      %p502 = pneg %p263
      %p503 = pneg %p260
      %p504 = pneg %p284
      %p505 = pneg %p281
      %p506 = pneg %p305
      %p507 = pneg %p302
      %p508 = pneg %p326
      %p509 = pneg %p323
      %p510 = pneg %p347
      %p511 = pneg %p344
      %p512 = pneg %p368
      %p513 = pneg %p365
      %p514 = pneg %p394
      %p515 = pneg %p391
      %p516 = scmp.lt.s32.totalorder %s27, 1
      %s517 = scalar_select %p516, %s27, 1
      %s518 = smul.addr %s517, 8
      %s519 = scalar_lea.vmem %s16, %s518
      %p520 = scmp.lt.s32.totalorder %s27, 1
      %s521 = scalar_select %p520, %s27, 1
      %s522 = smul.addr %s521, 8
      %s523 = scalar_lea.vmem %s0, %s522
      %p524 = scmp.lt.s32.totalorder %s27, 1
      %s525 = scalar_select %p524, %s27, 1
      %s526 = scalar_lea.vmem %s1, %s525
      %p527 = scmp.lt.s32.totalorder %s27, 1
      %s528 = scalar_select %p527, %s27, 1
      %s529 = smul.addr %s528, 8
      %s530 = scalar_lea.vmem %s16, %s529
      %v532 = vld [vmem:[%s523] sm:$0xff]
      %v533 = vpack.c.bf16 %v532, %v532
      %v534 = vld [vmem:[%s2] sm:$0xff]
      %v535 = vld [vmem:[%s2 + $0x8] sm:$0xff]
      %v536 = vld [vmem:[%s2 + $0x10] sm:$0xff]
      %v537 = vld [vmem:[%s2 + $0x18] sm:$0xff]
      %v538 = vld [vmem:[%s2 + $0x20] sm:$0xff]
      %v539 = vld [vmem:[%s2 + $0x28] sm:$0xff]
      %v540 = vld [vmem:[%s2 + $0x30] sm:$0xff]
      %v541 = vld [vmem:[%s2 + $0x38] sm:$0xff]
      %v542 = vld [vmem:[%s3] sm:$0x3]
      %v544 = vlaneseq
      %v545 = vshrl.u32 %v544, 7
      %v546 = vsub.s32 0, %v545
      %v547 = vrot.slane %v542, %v546
      %v548 = vlaneseq
      %v549 = vshrl.u32 %v548, 7
      %v550 = vsub.s32 1, %v549
      %v551 = vrot.slane %v542, %v550
      %v562 = vunpack.c.l.b16 %v534
      %v563 = vunpack.c.h.b16 %v534
      %v564 = vunpack.c.l.b16 %v535
      %v565 = vunpack.c.h.b16 %v535
      %v566 = vunpack.c.l.b16 %v536
      %v567 = vunpack.c.h.b16 %v536
      %v568 = vunpack.c.l.b16 %v537
      %v569 = vunpack.c.h.b16 %v537
      %v570 = vunpack.c.l.b16 %v538
      %v571 = vunpack.c.h.b16 %v538
      %v572 = vunpack.c.l.b16 %v539
      %v573 = vunpack.c.h.b16 %v539
      %v574 = vunpack.c.l.b16 %v540
      %v575 = vunpack.c.h.b16 %v540
      %v576 = vunpack.c.l.b16 %v541
      %v577 = vunpack.c.h.b16 %v541
      %v578 = vpack.c.b16 %v564, %v562
      %v579 = vpack.c.b16 %v565, %v563
      %v580 = vpack.c.b16 %v568, %v566
      %v581 = vpack.c.b16 %v569, %v567
      %v582 = vpack.c.b16 %v572, %v570
      %v583 = vpack.c.b16 %v573, %v571
      %v584 = vpack.c.b16 %v576, %v574
      %v585 = vpack.c.b16 %v577, %v575
      %vm594 = vcmask 523264
      %v596 = vsel %vm594, %v533, 0
      %598 = vmatprep.subr.bf16.mxu0 %v579
      %599 = vmatpush1.bf16.msra.mxu0 %v578
      %600 = vmatprep.subr.bf16.mxu0 %v581
      %601 = vmatpush1.bf16.msra.mxu0 %v580
      %602 = vmatprep.subr.bf16.mxu0 %v583
      %603 = vmatpush1.bf16.msra.mxu0 %v582
      %604 = vmatprep.subr.bf16.mxu0 %v585
      %605 = vmatpush1.bf16.msra.mxu0 %v584
      %606 = vmatprep.subr.bf16.mxu0 0
      %607 = vmatpush1.bf16.msra.mxu0 0
      %608 = vmatprep.subr.bf16.mxu0 0
      %609 = vmatpush1.bf16.msra.mxu0 0
      %610 = vmatprep.subr.bf16.mxu0 0
      %611 = vmatpush1.bf16.msra.mxu0 0
      %612 = vmatprep.subr.bf16.mxu0 0
      %613 = vmatpush1.bf16.msra.mxu0 0
      %614 = vmatprep.subr.bf16.mxu0 0
      %615 = vmatpush1.bf16.msra.mxu0 0
      %616 = vmatprep.subr.bf16.mxu0 0
      %617 = vmatpush1.bf16.msra.mxu0 0
      %618 = vmatprep.subr.bf16.mxu0 0
      %619 = vmatpush1.bf16.msra.mxu0 0
      %620 = vmatprep.subr.bf16.mxu0 0
      %621 = vmatpush1.bf16.msra.mxu0 0
      %622 = vmatprep.subr.bf16.mxu0 0
      %623 = vmatpush1.bf16.msra.mxu0 0
      %624 = vmatprep.subr.bf16.mxu0 0
      %625 = vmatpush1.bf16.msra.mxu0 0
      %626 = vmatprep.subr.bf16.mxu0 0
      %627 = vmatpush1.bf16.msra.mxu0 0
      %628 = vmatprep.subr.bf16.mxu0 0
      %629 = vmatpush1.bf16.msra.mxu0 0
      %630 = vmatprep.mubr.bf16.mxu0 0
      %631 = vmatmul.mubr.bf16.gmra.mrb[0].mxu0 %v596
      %v632 = vpop.f32.mrb[0].mxu0
      %v633 = vadd.f32 %v547, %v632
      %v634 = vpop.f32.mrb[0].mxu0
      %v635 = vadd.f32 %v551, %v634
      %v636 = vpop.f32.mrb[0].mxu0
      %v637 = vpop.f32.mrb[0].mxu0
      %638 = vdwg.mxu0
      %v639 = vld [vmem:[%s4] sm:$0xf]
      %v640 = vld [vmem:[%s4 + $0x4] sm:$0xf]
      %v641 = vld [vmem:[%s4 + $0x8] sm:$0xf]
      %v642 = vld [vmem:[%s4 + $0xc] sm:$0xf]
      %v643 = vld [vmem:[%s4 + $0x10] sm:$0xf]
      %v644 = vld [vmem:[%s4 + $0x14] sm:$0xf]
      %v645 = vld [vmem:[%s4 + $0x18] sm:$0xf]
      %v646 = vld [vmem:[%s4 + $0x1c] sm:$0xf]
      %v655 = vunpack.c.l.b16 %v639
      %v656 = vunpack.c.l.b16 %v640
      %v657 = vunpack.c.l.b16 %v641
      %v658 = vunpack.c.l.b16 %v642
      %v659 = vunpack.c.l.b16 %v643
      %v660 = vunpack.c.l.b16 %v644
      %v661 = vunpack.c.l.b16 %v645
      %v662 = vunpack.c.l.b16 %v646
      %v663 = vpack.c.b16 %v656, %v655
      %v664 = vpack.c.b16 %v658, %v657
      %v665 = vpack.c.b16 %v660, %v659
      %v666 = vpack.c.b16 %v662, %v661
      %671 = vmatprep.subr.bf16.mxu0 0
      %672 = vmatpush1.bf16.msra.mxu0 %v663
      %673 = vmatprep.subr.bf16.mxu0 0
      %674 = vmatpush1.bf16.msra.mxu0 %v664
      %675 = vmatprep.subr.bf16.mxu0 0
      %676 = vmatpush1.bf16.msra.mxu0 %v665
      %677 = vmatprep.subr.bf16.mxu0 0
      %678 = vmatpush1.bf16.msra.mxu0 %v666
      %679 = vmatprep.subr.bf16.mxu0 0
      %680 = vmatpush1.bf16.msra.mxu0 0
      %681 = vmatprep.subr.bf16.mxu0 0
      %682 = vmatpush1.bf16.msra.mxu0 0
      %683 = vmatprep.subr.bf16.mxu0 0
      %684 = vmatpush1.bf16.msra.mxu0 0
      %685 = vmatprep.subr.bf16.mxu0 0
      %686 = vmatpush1.bf16.msra.mxu0 0
      %687 = vmatprep.subr.bf16.mxu0 0
      %688 = vmatpush1.bf16.msra.mxu0 0
      %689 = vmatprep.subr.bf16.mxu0 0
      %690 = vmatpush1.bf16.msra.mxu0 0
      %691 = vmatprep.subr.bf16.mxu0 0
      %692 = vmatpush1.bf16.msra.mxu0 0
      %693 = vmatprep.subr.bf16.mxu0 0
      %694 = vmatpush1.bf16.msra.mxu0 0
      %695 = vmatprep.subr.bf16.mxu0 0
      %696 = vmatpush1.bf16.msra.mxu0 0
      %697 = vmatprep.subr.bf16.mxu0 0
      %698 = vmatpush1.bf16.msra.mxu0 0
      %699 = vmatprep.subr.bf16.mxu0 0
      %700 = vmatpush1.bf16.msra.mxu0 0
      %701 = vmatprep.subr.bf16.mxu0 0
      %702 = vmatpush1.bf16.msra.mxu0 0
      %703 = vmatprep.mubr.bf16.mxu0 0
      %704 = vmatmul.mubr.bf16.gmra.mrb[0].mxu0 %v596
      %v705 = vpop.f32.mrb[0].mxu0
      %v706 = vadd.f32 0.0, %v705
      %v707 = vpop.f32.mrb[0].mxu0
      %v708 = vpop.f32.mrb[0].mxu0
      %v709 = vpop.f32.mrb[0].mxu0
      %710 = vdwg.mxu0
      %v711 = vpack.c.bf16 %v706, %v706
      %v712 = vld [vmem:[%s5] sm:$0xf]
      %v713 = vld [vmem:[%s5 + $0x4] sm:$0xf]
      %v716 = vunpack.c.l.b16 %v712
      %v717 = vunpack.c.l.b16 %v713
      %v718 = vpack.c.b16 %v717, %v716
      %vm720 = vcmask 130048
      %v722 = vsel %vm720, %v711, 0
      %724 = vmatprep.subr.bf16.mxu0 0
      %725 = vmatpush1.bf16.msra.mxu0 %v718
      %726 = vmatprep.subr.bf16.mxu0 0
      %727 = vmatpush1.bf16.msra.mxu0 0
      %728 = vmatprep.subr.bf16.mxu0 0
      %729 = vmatpush1.bf16.msra.mxu0 0
      %730 = vmatprep.subr.bf16.mxu0 0
      %731 = vmatpush1.bf16.msra.mxu0 0
      %732 = vmatprep.subr.bf16.mxu0 0
      %733 = vmatpush1.bf16.msra.mxu0 0
      %734 = vmatprep.subr.bf16.mxu0 0
      %735 = vmatpush1.bf16.msra.mxu0 0
      %736 = vmatprep.subr.bf16.mxu0 0
      %737 = vmatpush1.bf16.msra.mxu0 0
      %738 = vmatprep.subr.bf16.mxu0 0
      %739 = vmatpush1.bf16.msra.mxu0 0
      %740 = vmatprep.subr.bf16.mxu0 0
      %741 = vmatpush1.bf16.msra.mxu0 0
      %742 = vmatprep.subr.bf16.mxu0 0
      %743 = vmatpush1.bf16.msra.mxu0 0
      %744 = vmatprep.subr.bf16.mxu0 0
      %745 = vmatpush1.bf16.msra.mxu0 0
      %746 = vmatprep.subr.bf16.mxu0 0
      %747 = vmatpush1.bf16.msra.mxu0 0
      %748 = vmatprep.subr.bf16.mxu0 0
      %749 = vmatpush1.bf16.msra.mxu0 0
      %750 = vmatprep.subr.bf16.mxu0 0
      %751 = vmatpush1.bf16.msra.mxu0 0
      %752 = vmatprep.subr.bf16.mxu0 0
      %753 = vmatpush1.bf16.msra.mxu0 0
      %754 = vmatprep.subr.bf16.mxu0 0
      %755 = vmatpush1.bf16.msra.mxu0 0
      %756 = vmatprep.mubr.bf16.mxu0 0
      %757 = vmatmul.mubr.bf16.gmra.mrb[0].mxu0 %v722
      %v758 = vpop.f32.mrb[0].mxu0
      %v759 = vadd.f32 0.0, %v758
      %v760 = vpop.f32.mrb[0].mxu0
      %v761 = vpop.f32.mrb[0].mxu0
      %v762 = vpop.f32.mrb[0].mxu0
      %763 = vdwg.mxu0
      %v764 = vadd.f32 %v633, %v759
      %766 = vrot.lane.b32.xlu0 %v759, 64
      %v767 = vpop.permute.xlu0 %766
      %v769 = vadd.f32 %v635, %v767
      %v770 = vld [vmem:[%s526] sm:$0x1]
      %v771 = vpack.c.bf16 %v764, %v764
      %v772 = vpack.c.bf16 %v633, %v633
      %v773 = vpack.c.bf16 %v769, %v769
      %775 = vrot.lane.b32.xlu0 %v772, 64
      %v776 = vpop.permute.xlu0 %775
      %v778 = vsel %vm720, %v771, 0
      %v781 = vsel %vm720, %v776, 0
      %783 = vmatprep.subr.bf16.mxu0 0
      %784 = vmatpush1.bf16.xpose.msra.mxu0 %v781
      %785 = vmatprep.subr.bf16.mxu0 0
      %786 = vmatpush1.bf16.xpose.msra.mxu0 0
      %787 = vmatprep.subr.bf16.mxu0 0
      %788 = vmatpush1.bf16.xpose.msra.mxu0 0
      %789 = vmatprep.subr.bf16.mxu0 0
      %790 = vmatpush1.bf16.xpose.msra.mxu0 0
      %791 = vmatprep.subr.bf16.mxu0 0
      %792 = vmatpush1.bf16.xpose.msra.mxu0 0
      %793 = vmatprep.subr.bf16.mxu0 0
      %794 = vmatpush1.bf16.xpose.msra.mxu0 0
      %795 = vmatprep.subr.bf16.mxu0 0
      %796 = vmatpush1.bf16.xpose.msra.mxu0 0
      %797 = vmatprep.subr.bf16.mxu0 0
      %798 = vmatpush1.bf16.xpose.msra.mxu0 0
      %799 = vmatprep.subr.bf16.mxu0 0
      %800 = vmatpush1.bf16.xpose.msra.mxu0 0
      %801 = vmatprep.subr.bf16.mxu0 0
      %802 = vmatpush1.bf16.xpose.msra.mxu0 0
      %803 = vmatprep.subr.bf16.mxu0 0
      %804 = vmatpush1.bf16.xpose.msra.mxu0 0
      %805 = vmatprep.subr.bf16.mxu0 0
      %806 = vmatpush1.bf16.xpose.msra.mxu0 0
      %807 = vmatprep.subr.bf16.mxu0 0
      %808 = vmatpush1.bf16.xpose.msra.mxu0 0
      %809 = vmatprep.subr.bf16.mxu0 0
      %810 = vmatpush1.bf16.xpose.msra.mxu0 0
      %811 = vmatprep.subr.bf16.mxu0 0
      %812 = vmatpush1.bf16.xpose.msra.mxu0 0
      %813 = vmatprep.subr.bf16.mxu0 0
      %814 = vmatpush1.bf16.xpose.msra.mxu0 0
      %815 = vmatprep.mubr.bf16.mxu0 0
      %816 = vmatmul.mubr.bf16.gmra.mrb[0].mxu0 %v778
      %v817 = vpop.f32.mrb[0].mxu0
      %v818 = vadd.f32 0.0, %v817
      %v819 = vpop.f32.mrb[0].mxu0
      %v820 = vpop.f32.mrb[0].mxu0
      %v821 = vpop.f32.mrb[0].mxu0
      %822 = vdwg.mxu0
      %v823 = vmul.f32 %v818, 0.25
      %v825 = vlaneseq
      %v826 = vshrl.u32 %v825, 7
      %v827 = vsub.s32 0, %v826
      %v828 = vrot.slane %v770, %v827
      %v830 = vadd.f32 %v823, %v828
      %vm831 = vcmask 64512
      %v832 = vsel %vm831, %v830, -inf
      %833 = vmax.xlane.f32.xlu0 %v832
      %v834 = vpop.xlane.xlu0 %833
      %v835 = vsub.f32 %v830, %v834
      %v836 = vmul.f32 %v835, 1.442695
      %v837 = vpow.pop %v836
      %v838 = vsel %vm831, %v837, 0.0
      %839 = vadd.xlane.f32.xlu0 %v838
      %v840 = vpop.xlane.xlu0 %839
      %v841 = vrcp.pop %v840
      %v842 = vmul.f32 %v837, %v841
      %v843 = vpack.c.bf16 %v842, %v842
      %v845 = vsel %vm831, %v843, 0
      %vm847 = vcmask 1043456
      %v849 = vsel %vm847, %v773, 0
      %851 = vmatprep.subr.bf16.mxu0 0
      %852 = vmatpush1.bf16.msra.mxu0 %v849
      %853 = vmatprep.subr.bf16.mxu0 0
      %854 = vmatpush1.bf16.msra.mxu0 0
      %855 = vmatprep.subr.bf16.mxu0 0
      %856 = vmatpush1.bf16.msra.mxu0 0
      %857 = vmatprep.subr.bf16.mxu0 0
      %858 = vmatpush1.bf16.msra.mxu0 0
      %859 = vmatprep.subr.bf16.mxu0 0
      %860 = vmatpush1.bf16.msra.mxu0 0
      %861 = vmatprep.subr.bf16.mxu0 0
      %862 = vmatpush1.bf16.msra.mxu0 0
      %863 = vmatprep.subr.bf16.mxu0 0
      %864 = vmatpush1.bf16.msra.mxu0 0
      %865 = vmatprep.subr.bf16.mxu0 0
      %866 = vmatpush1.bf16.msra.mxu0 0
      %867 = vmatprep.subr.bf16.mxu0 0
      %868 = vmatpush1.bf16.msra.mxu0 0
      %869 = vmatprep.subr.bf16.mxu0 0
      %870 = vmatpush1.bf16.msra.mxu0 0
      %871 = vmatprep.subr.bf16.mxu0 0
      %872 = vmatpush1.bf16.msra.mxu0 0
      %873 = vmatprep.subr.bf16.mxu0 0
      %874 = vmatpush1.bf16.msra.mxu0 0
      %875 = vmatprep.subr.bf16.mxu0 0
      %876 = vmatpush1.bf16.msra.mxu0 0
      %877 = vmatprep.subr.bf16.mxu0 0
      %878 = vmatpush1.bf16.msra.mxu0 0
      %879 = vmatprep.subr.bf16.mxu0 0
      %880 = vmatpush1.bf16.msra.mxu0 0
      %881 = vmatprep.subr.bf16.mxu0 0
      %882 = vmatpush1.bf16.msra.mxu0 0
      %883 = vmatprep.mubr.bf16.mxu0 0
      %884 = vmatmul.mubr.bf16.gmra.mrb[0].mxu0 %v845
      %v885 = vpop.f32.mrb[0].mxu0
      %v886 = vadd.f32 0.0, %v885
      %v887 = vpop.f32.mrb[0].mxu0
      %v888 = vpop.f32.mrb[0].mxu0
      %v889 = vpop.f32.mrb[0].mxu0
      %890 = vdwg.mxu0
      %892 = vrot.lane.b32.xlu0 %v771, 112
      %v893 = vpop.permute.xlu0 %892
      %894 = vrot.lane.b32.xlu0 %v772, 48
      %v895 = vpop.permute.xlu0 %894
      %v897 = vsel %vm720, %v893, 0
      %v900 = vsel %vm720, %v895, 0
      %902 = vmatprep.subr.bf16.mxu0 0
      %903 = vmatpush1.bf16.xpose.msra.mxu0 %v900
      %904 = vmatprep.subr.bf16.mxu0 0
      %905 = vmatpush1.bf16.xpose.msra.mxu0 0
      %906 = vmatprep.subr.bf16.mxu0 0
      %907 = vmatpush1.bf16.xpose.msra.mxu0 0
      %908 = vmatprep.subr.bf16.mxu0 0
      %909 = vmatpush1.bf16.xpose.msra.mxu0 0
      %910 = vmatprep.subr.bf16.mxu0 0
      %911 = vmatpush1.bf16.xpose.msra.mxu0 0
      %912 = vmatprep.subr.bf16.mxu0 0
      %913 = vmatpush1.bf16.xpose.msra.mxu0 0
      %914 = vmatprep.subr.bf16.mxu0 0
      %915 = vmatpush1.bf16.xpose.msra.mxu0 0
      %916 = vmatprep.subr.bf16.mxu0 0
      %917 = vmatpush1.bf16.xpose.msra.mxu0 0
      %918 = vmatprep.subr.bf16.mxu0 0
      %919 = vmatpush1.bf16.xpose.msra.mxu0 0
      %920 = vmatprep.subr.bf16.mxu0 0
      %921 = vmatpush1.bf16.xpose.msra.mxu0 0
      %922 = vmatprep.subr.bf16.mxu0 0
      %923 = vmatpush1.bf16.xpose.msra.mxu0 0
      %924 = vmatprep.subr.bf16.mxu0 0
      %925 = vmatpush1.bf16.xpose.msra.mxu0 0
      %926 = vmatprep.subr.bf16.mxu0 0
      %927 = vmatpush1.bf16.xpose.msra.mxu0 0
      %928 = vmatprep.subr.bf16.mxu0 0
      %929 = vmatpush1.bf16.xpose.msra.mxu0 0
      %930 = vmatprep.subr.bf16.mxu0 0
      %931 = vmatpush1.bf16.xpose.msra.mxu0 0
      %932 = vmatprep.subr.bf16.mxu0 0
      %933 = vmatpush1.bf16.xpose.msra.mxu0 0
      %934 = vmatprep.mubr.bf16.mxu0 0
      %935 = vmatmul.mubr.bf16.gmra.mrb[0].mxu0 %v897
      %v936 = vpop.f32.mrb[0].mxu0
      %v937 = vadd.f32 0.0, %v936
      %v938 = vpop.f32.mrb[0].mxu0
      %v939 = vpop.f32.mrb[0].mxu0
      %v940 = vpop.f32.mrb[0].mxu0
      %941 = vdwg.mxu0
      %v942 = vmul.f32 %v937, 0.25
      %v943 = vadd.f32 %v942, %v828
      %v944 = vsel %vm831, %v943, -inf
      %945 = vmax.xlane.f32.xlu0 %v944
      %v946 = vpop.xlane.xlu0 %945
      %v947 = vsub.f32 %v943, %v946
      %v948 = vmul.f32 %v947, 1.442695
      %v949 = vpow.pop %v948
      %v950 = vsel %vm831, %v949, 0.0
      %951 = vadd.xlane.f32.xlu0 %v950
      %v952 = vpop.xlane.xlu0 %951
      %v953 = vrcp.pop %v952
      %v954 = vmul.f32 %v949, %v953
      %v955 = vpack.c.bf16 %v954, %v954
      %957 = vrot.lane.b32.xlu0 %v773, 112
      %v958 = vpop.permute.xlu0 %957
      %v960 = vsel %vm831, %v955, 0
      %v963 = vsel %vm847, %v958, 0
      %965 = vmatprep.subr.bf16.mxu0 0
      %966 = vmatpush1.bf16.msra.mxu0 %v963
      %967 = vmatprep.subr.bf16.mxu0 0
      %968 = vmatpush1.bf16.msra.mxu0 0
      %969 = vmatprep.subr.bf16.mxu0 0
      %970 = vmatpush1.bf16.msra.mxu0 0
      %971 = vmatprep.subr.bf16.mxu0 0
      %972 = vmatpush1.bf16.msra.mxu0 0
      %973 = vmatprep.subr.bf16.mxu0 0
      %974 = vmatpush1.bf16.msra.mxu0 0
      %975 = vmatprep.subr.bf16.mxu0 0
      %976 = vmatpush1.bf16.msra.mxu0 0
      %977 = vmatprep.subr.bf16.mxu0 0
      %978 = vmatpush1.bf16.msra.mxu0 0
      %979 = vmatprep.subr.bf16.mxu0 0
      %980 = vmatpush1.bf16.msra.mxu0 0
      %981 = vmatprep.subr.bf16.mxu0 0
      %982 = vmatpush1.bf16.msra.mxu0 0
      %983 = vmatprep.subr.bf16.mxu0 0
      %984 = vmatpush1.bf16.msra.mxu0 0
      %985 = vmatprep.subr.bf16.mxu0 0
      %986 = vmatpush1.bf16.msra.mxu0 0
      %987 = vmatprep.subr.bf16.mxu0 0
      %988 = vmatpush1.bf16.msra.mxu0 0
      %989 = vmatprep.subr.bf16.mxu0 0
      %990 = vmatpush1.bf16.msra.mxu0 0
      %991 = vmatprep.subr.bf16.mxu0 0
      %992 = vmatpush1.bf16.msra.mxu0 0
      %993 = vmatprep.subr.bf16.mxu0 0
      %994 = vmatpush1.bf16.msra.mxu0 0
      %995 = vmatprep.subr.bf16.mxu0 0
      %996 = vmatpush1.bf16.msra.mxu0 0
      %997 = vmatprep.mubr.bf16.mxu0 0
      %998 = vmatmul.mubr.bf16.gmra.mrb[0].mxu0 %v960
      %v999 = vpop.f32.mrb[0].mxu0
      %v1000 = vadd.f32 0.0, %v999
      %v1001 = vpop.f32.mrb[0].mxu0
      %v1002 = vpop.f32.mrb[0].mxu0
      %v1003 = vpop.f32.mrb[0].mxu0
      %1004 = vdwg.mxu0
      %1005 = vrot.lane.b32.xlu0 %v771, 96
      %v1006 = vpop.permute.xlu0 %1005
      %1007 = vrot.lane.b32.xlu0 %v772, 32
      %v1008 = vpop.permute.xlu0 %1007
      %v1010 = vsel %vm720, %v1006, 0
      %v1013 = vsel %vm720, %v1008, 0
      %1015 = vmatprep.subr.bf16.mxu0 0
      %1016 = vmatpush1.bf16.xpose.msra.mxu0 %v1013
      %1017 = vmatprep.subr.bf16.mxu0 0
      %1018 = vmatpush1.bf16.xpose.msra.mxu0 0
      %1019 = vmatprep.subr.bf16.mxu0 0
      %1020 = vmatpush1.bf16.xpose.msra.mxu0 0
      %1021 = vmatprep.subr.bf16.mxu0 0
      %1022 = vmatpush1.bf16.xpose.msra.mxu0 0
      %1023 = vmatprep.subr.bf16.mxu0 0
      %1024 = vmatpush1.bf16.xpose.msra.mxu0 0
      %1025 = vmatprep.subr.bf16.mxu0 0
      %1026 = vmatpush1.bf16.xpose.msra.mxu0 0
      %1027 = vmatprep.subr.bf16.mxu0 0
      %1028 = vmatpush1.bf16.xpose.msra.mxu0 0
      %1029 = vmatprep.subr.bf16.mxu0 0
      %1030 = vmatpush1.bf16.xpose.msra.mxu0 0
      %1031 = vmatprep.subr.bf16.mxu0 0
      %1032 = vmatpush1.bf16.xpose.msra.mxu0 0
      %1033 = vmatprep.subr.bf16.mxu0 0
      %1034 = vmatpush1.bf16.xpose.msra.mxu0 0
      %1035 = vmatprep.subr.bf16.mxu0 0
      %1036 = vmatpush1.bf16.xpose.msra.mxu0 0
      %1037 = vmatprep.subr.bf16.mxu0 0
      %1038 = vmatpush1.bf16.xpose.msra.mxu0 0
      %1039 = vmatprep.subr.bf16.mxu0 0
      %1040 = vmatpush1.bf16.xpose.msra.mxu0 0
      %1041 = vmatprep.subr.bf16.mxu0 0
      %1042 = vmatpush1.bf16.xpose.msra.mxu0 0
      %1043 = vmatprep.subr.bf16.mxu0 0
      %1044 = vmatpush1.bf16.xpose.msra.mxu0 0
      %1045 = vmatprep.subr.bf16.mxu0 0
      %1046 = vmatpush1.bf16.xpose.msra.mxu0 0
      %1047 = vmatprep.mubr.bf16.mxu0 0
      %1048 = vmatmul.mubr.bf16.gmra.mrb[0].mxu0 %v1010
      %v1049 = vpop.f32.mrb[0].mxu0
      %v1050 = vadd.f32 0.0, %v1049
      %v1051 = vpop.f32.mrb[0].mxu0
      %v1052 = vpop.f32.mrb[0].mxu0
      %v1053 = vpop.f32.mrb[0].mxu0
      %1054 = vdwg.mxu0
      %v1055 = vmul.f32 %v1050, 0.25
      %v1056 = vadd.f32 %v1055, %v828
      %v1057 = vsel %vm831, %v1056, -inf
      %1058 = vmax.xlane.f32.xlu0 %v1057
      %v1059 = vpop.xlane.xlu0 %1058
      %v1060 = vsub.f32 %v1056, %v1059
      %v1061 = vmul.f32 %v1060, 1.442695
      %v1062 = vpow.pop %v1061
      %v1063 = vsel %vm831, %v1062, 0.0
      %1064 = vadd.xlane.f32.xlu0 %v1063
      %v1065 = vpop.xlane.xlu0 %1064
      %v1066 = vrcp.pop %v1065
      %v1067 = vmul.f32 %v1062, %v1066
      %v1068 = vpack.c.bf16 %v1067, %v1067
      %1069 = vrot.lane.b32.xlu0 %v773, 96
      %v1070 = vpop.permute.xlu0 %1069
      %v1072 = vsel %vm831, %v1068, 0
      %v1075 = vsel %vm847, %v1070, 0
      %1077 = vmatprep.subr.bf16.mxu0 0
      %1078 = vmatpush1.bf16.msra.mxu0 %v1075
      %1079 = vmatprep.subr.bf16.mxu0 0
      %1080 = vmatpush1.bf16.msra.mxu0 0
      %1081 = vmatprep.subr.bf16.mxu0 0
      %1082 = vmatpush1.bf16.msra.mxu0 0
      %1083 = vmatprep.subr.bf16.mxu0 0
      %1084 = vmatpush1.bf16.msra.mxu0 0
      %1085 = vmatprep.subr.bf16.mxu0 0
      %1086 = vmatpush1.bf16.msra.mxu0 0
      %1087 = vmatprep.subr.bf16.mxu0 0
      %1088 = vmatpush1.bf16.msra.mxu0 0
      %1089 = vmatprep.subr.bf16.mxu0 0
      %1090 = vmatpush1.bf16.msra.mxu0 0
      %1091 = vmatprep.subr.bf16.mxu0 0
      %1092 = vmatpush1.bf16.msra.mxu0 0
      %1093 = vmatprep.subr.bf16.mxu0 0
      %1094 = vmatpush1.bf16.msra.mxu0 0
      %1095 = vmatprep.subr.bf16.mxu0 0
      %1096 = vmatpush1.bf16.msra.mxu0 0
      %1097 = vmatprep.subr.bf16.mxu0 0
      %1098 = vmatpush1.bf16.msra.mxu0 0
      %1099 = vmatprep.subr.bf16.mxu0 0
      %1100 = vmatpush1.bf16.msra.mxu0 0
      %1101 = vmatprep.subr.bf16.mxu0 0
      %1102 = vmatpush1.bf16.msra.mxu0 0
      %1103 = vmatprep.subr.bf16.mxu0 0
      %1104 = vmatpush1.bf16.msra.mxu0 0
      %1105 = vmatprep.subr.bf16.mxu0 0
      %1106 = vmatpush1.bf16.msra.mxu0 0
      %1107 = vmatprep.subr.bf16.mxu0 0
      %1108 = vmatpush1.bf16.msra.mxu0 0
      %1109 = vmatprep.mubr.bf16.mxu0 0
      %1110 = vmatmul.mubr.bf16.gmra.mrb[0].mxu0 %v1072
      %v1111 = vpop.f32.mrb[0].mxu0
      %v1112 = vadd.f32 0.0, %v1111
      %v1113 = vpop.f32.mrb[0].mxu0
      %v1114 = vpop.f32.mrb[0].mxu0
      %v1115 = vpop.f32.mrb[0].mxu0
      %1116 = vdwg.mxu0
      %1117 = vrot.lane.b32.xlu0 %v771, 80
      %v1118 = vpop.permute.xlu0 %1117
      %1119 = vrot.lane.b32.xlu0 %v772, 16
      %v1120 = vpop.permute.xlu0 %1119
      %v1122 = vsel %vm720, %v1118, 0
      %v1125 = vsel %vm720, %v1120, 0
      %1127 = vmatprep.subr.bf16.mxu0 0
      %1128 = vmatpush1.bf16.xpose.msra.mxu0 %v1125
      %1129 = vmatprep.subr.bf16.mxu0 0
      %1130 = vmatpush1.bf16.xpose.msra.mxu0 0
      %1131 = vmatprep.subr.bf16.mxu0 0
      %1132 = vmatpush1.bf16.xpose.msra.mxu0 0
      %1133 = vmatprep.subr.bf16.mxu0 0
      %1134 = vmatpush1.bf16.xpose.msra.mxu0 0
      %1135 = vmatprep.subr.bf16.mxu0 0
      %1136 = vmatpush1.bf16.xpose.msra.mxu0 0
      %1137 = vmatprep.subr.bf16.mxu0 0
      %1138 = vmatpush1.bf16.xpose.msra.mxu0 0
      %1139 = vmatprep.subr.bf16.mxu0 0
      %1140 = vmatpush1.bf16.xpose.msra.mxu0 0
      %1141 = vmatprep.subr.bf16.mxu0 0
      %1142 = vmatpush1.bf16.xpose.msra.mxu0 0
      %1143 = vmatprep.subr.bf16.mxu0 0
      %1144 = vmatpush1.bf16.xpose.msra.mxu0 0
      %1145 = vmatprep.subr.bf16.mxu0 0
      %1146 = vmatpush1.bf16.xpose.msra.mxu0 0
      %1147 = vmatprep.subr.bf16.mxu0 0
      %1148 = vmatpush1.bf16.xpose.msra.mxu0 0
      %1149 = vmatprep.subr.bf16.mxu0 0
      %1150 = vmatpush1.bf16.xpose.msra.mxu0 0
      %1151 = vmatprep.subr.bf16.mxu0 0
      %1152 = vmatpush1.bf16.xpose.msra.mxu0 0
      %1153 = vmatprep.subr.bf16.mxu0 0
      %1154 = vmatpush1.bf16.xpose.msra.mxu0 0
      %1155 = vmatprep.subr.bf16.mxu0 0
      %1156 = vmatpush1.bf16.xpose.msra.mxu0 0
      %1157 = vmatprep.subr.bf16.mxu0 0
      %1158 = vmatpush1.bf16.xpose.msra.mxu0 0
      %1159 = vmatprep.mubr.bf16.mxu0 0
      %1160 = vmatmul.mubr.bf16.gmra.mrb[0].mxu0 %v1122
      %v1161 = vpop.f32.mrb[0].mxu0
      %v1162 = vadd.f32 0.0, %v1161
      %v1163 = vpop.f32.mrb[0].mxu0
      %v1164 = vpop.f32.mrb[0].mxu0
      %v1165 = vpop.f32.mrb[0].mxu0
      %1166 = vdwg.mxu0
      %v1167 = vmul.f32 %v1162, 0.25
      %v1168 = vadd.f32 %v1167, %v828
      %v1169 = vsel %vm831, %v1168, -inf
      %1170 = vmax.xlane.f32.xlu0 %v1169
      %v1171 = vpop.xlane.xlu0 %1170
      %v1172 = vsub.f32 %v1168, %v1171
      %v1173 = vmul.f32 %v1172, 1.442695
      %v1174 = vpow.pop %v1173
      %v1175 = vsel %vm831, %v1174, 0.0
      %1176 = vadd.xlane.f32.xlu0 %v1175
      %v1177 = vpop.xlane.xlu0 %1176
      %v1178 = vrcp.pop %v1177
      %v1179 = vmul.f32 %v1174, %v1178
      %v1180 = vpack.c.bf16 %v1179, %v1179
      %1181 = vrot.lane.b32.xlu0 %v773, 80
      %v1182 = vpop.permute.xlu0 %1181
      %v1184 = vsel %vm831, %v1180, 0
      %v1187 = vsel %vm847, %v1182, 0
      %1189 = vmatprep.subr.bf16.mxu0 0
      %1190 = vmatpush1.bf16.msra.mxu0 %v1187
      %1191 = vmatprep.subr.bf16.mxu0 0
      %1192 = vmatpush1.bf16.msra.mxu0 0
      %1193 = vmatprep.subr.bf16.mxu0 0
      %1194 = vmatpush1.bf16.msra.mxu0 0
      %1195 = vmatprep.subr.bf16.mxu0 0
      %1196 = vmatpush1.bf16.msra.mxu0 0
      %1197 = vmatprep.subr.bf16.mxu0 0
      %1198 = vmatpush1.bf16.msra.mxu0 0
      %1199 = vmatprep.subr.bf16.mxu0 0
      %1200 = vmatpush1.bf16.msra.mxu0 0
      %1201 = vmatprep.subr.bf16.mxu0 0
      %1202 = vmatpush1.bf16.msra.mxu0 0
      %1203 = vmatprep.subr.bf16.mxu0 0
      %1204 = vmatpush1.bf16.msra.mxu0 0
      %1205 = vmatprep.subr.bf16.mxu0 0
      %1206 = vmatpush1.bf16.msra.mxu0 0
      %1207 = vmatprep.subr.bf16.mxu0 0
      %1208 = vmatpush1.bf16.msra.mxu0 0
      %1209 = vmatprep.subr.bf16.mxu0 0
      %1210 = vmatpush1.bf16.msra.mxu0 0
      %1211 = vmatprep.subr.bf16.mxu0 0
      %1212 = vmatpush1.bf16.msra.mxu0 0
      %1213 = vmatprep.subr.bf16.mxu0 0
      %1214 = vmatpush1.bf16.msra.mxu0 0
      %1215 = vmatprep.subr.bf16.mxu0 0
      %1216 = vmatpush1.bf16.msra.mxu0 0
      %1217 = vmatprep.subr.bf16.mxu0 0
      %1218 = vmatpush1.bf16.msra.mxu0 0
      %1219 = vmatprep.subr.bf16.mxu0 0
      %1220 = vmatpush1.bf16.msra.mxu0 0
      %1221 = vmatprep.mubr.bf16.mxu0 0
      %1222 = vmatmul.mubr.bf16.gmra.mrb[0].mxu0 %v1184
      %v1223 = vpop.f32.mrb[0].mxu0
      %v1224 = vadd.f32 0.0, %v1223
      %v1225 = vpop.f32.mrb[0].mxu0
      %v1226 = vpop.f32.mrb[0].mxu0
      %v1227 = vpop.f32.mrb[0].mxu0
      %1228 = vdwg.mxu0
      %1230 = vrot.lane.b32.xlu0 %v1000, 16
      %v1231 = vpop.permute.xlu0 %1230
      %1234 = vrot.lane.b32.xlu0 %v1112, 32
      %v1235 = vpop.permute.xlu0 %1234
      %1238 = vrot.lane.b32.xlu0 %v1224, 48
      %v1239 = vpop.permute.xlu0 %1238
      %v1241 = vsel %vm720, %v886, %v1231
      %vm1242 = vcmask 261120
      %v1243 = vsel %vm1242, %v1241, %v1235
      %vm1244 = vcmask 392192
      %v1245 = vsel %vm1244, %v1243, %v1239
      %v1246 = vpack.c.bf16 %v1245, %v1245
      %v1247 = vld [vmem:[%s6] sm:$0xf]
      %v1248 = vld [vmem:[%s6 + $0x4] sm:$0xf]
      %v1249 = vld [vmem:[%s6 + $0x8] sm:$0xf]
      %v1250 = vld [vmem:[%s6 + $0xc] sm:$0xf]
      %v1251 = vld [vmem:[%s6 + $0x10] sm:$0xf]
      %v1252 = vld [vmem:[%s6 + $0x14] sm:$0xf]
      %v1253 = vld [vmem:[%s6 + $0x18] sm:$0xf]
      %v1254 = vld [vmem:[%s6 + $0x1c] sm:$0xf]
      %v1255 = vld [vmem:[%s7] sm:$0x1]
      %v1257 = vlaneseq
      %v1258 = vshrl.u32 %v1257, 7
      %v1259 = vsub.s32 0, %v1258
      %v1260 = vrot.slane %v1255, %v1259
      %v1270 = vunpack.c.l.b16 %v1247
      %v1271 = vunpack.c.l.b16 %v1248
      %v1272 = vunpack.c.l.b16 %v1249
      %v1273 = vunpack.c.l.b16 %v1250
      %v1274 = vunpack.c.l.b16 %v1251
      %v1275 = vunpack.c.l.b16 %v1252
      %v1276 = vunpack.c.l.b16 %v1253
      %v1277 = vunpack.c.l.b16 %v1254
      %v1278 = vpack.c.b16 %v1271, %v1270
      %v1279 = vpack.c.b16 %v1273, %v1272
      %v1280 = vpack.c.b16 %v1275, %v1274
      %v1281 = vpack.c.b16 %v1277, %v1276
      %v1287 = vsel %vm594, %v1246, 0
      %1289 = vmatprep.subr.bf16.mxu0 0
      %1290 = vmatpush1.bf16.msra.mxu0 %v1278
      %1291 = vmatprep.subr.bf16.mxu0 0
      %1292 = vmatpush1.bf16.msra.mxu0 %v1279
      %1293 = vmatprep.subr.bf16.mxu0 0
      %1294 = vmatpush1.bf16.msra.mxu0 %v1280
      %1295 = vmatprep.subr.bf16.mxu0 0
      %1296 = vmatpush1.bf16.msra.mxu0 %v1281
      %1297 = vmatprep.subr.bf16.mxu0 0
      %1298 = vmatpush1.bf16.msra.mxu0 0
      %1299 = vmatprep.subr.bf16.mxu0 0
      %1300 = vmatpush1.bf16.msra.mxu0 0
      %1301 = vmatprep.subr.bf16.mxu0 0
      %1302 = vmatpush1.bf16.msra.mxu0 0
      %1303 = vmatprep.subr.bf16.mxu0 0
      %1304 = vmatpush1.bf16.msra.mxu0 0
      %1305 = vmatprep.subr.bf16.mxu0 0
      %1306 = vmatpush1.bf16.msra.mxu0 0
      %1307 = vmatprep.subr.bf16.mxu0 0
      %1308 = vmatpush1.bf16.msra.mxu0 0
      %1309 = vmatprep.subr.bf16.mxu0 0
      %1310 = vmatpush1.bf16.msra.mxu0 0
      %1311 = vmatprep.subr.bf16.mxu0 0
      %1312 = vmatpush1.bf16.msra.mxu0 0
      %1313 = vmatprep.subr.bf16.mxu0 0
      %1314 = vmatpush1.bf16.msra.mxu0 0
      %1315 = vmatprep.subr.bf16.mxu0 0
      %1316 = vmatpush1.bf16.msra.mxu0 0
      %1317 = vmatprep.subr.bf16.mxu0 0
      %1318 = vmatpush1.bf16.msra.mxu0 0
      %1319 = vmatprep.subr.bf16.mxu0 0
      %1320 = vmatpush1.bf16.msra.mxu0 0
      %1321 = vmatprep.mubr.bf16.mxu0 0
      %1322 = vmatmul.mubr.bf16.gmra.mrb[0].mxu0 %v1287
      %v1323 = vpop.f32.mrb[0].mxu0
      %v1324 = vadd.f32 %v1260, %v1323
      %v1325 = vpop.f32.mrb[0].mxu0
      %v1326 = vpop.f32.mrb[0].mxu0
      %v1327 = vpop.f32.mrb[0].mxu0
      %1328 = vdwg.mxu0
      %v1329 = vadd.f32 %v1324, %v532
      %v1330 = vld [vmem:[%s8] sm:$0x1]
      %v1331 = vld [vmem:[%s9] sm:$0x1]
      %v1332 = vsel %vm594, %v1329, 0.0
      %1333 = vadd.xlane.f32.xlu0 %v1332
      %v1334 = vpop.xlane.xlu0 %1333
      %v1335 = vrcp.pop 64.0
      %v1336 = vmul.f32 %v1334, %v1335
      %v1337 = vsub.f32 %v1329, %v1336
      %v1338 = vmul.f32 %v1337, %v1337
      %v1339 = vsel %vm594, %v1338, 0.0
      %1340 = vadd.xlane.f32.xlu0 %v1339
      %v1341 = vpop.xlane.xlu0 %1340
      %v1342 = vmul.f32 %v1341, %v1335
      %v1343 = vadd.f32 %v1342, 1e-05
      %v1344 = vrsqrt.pop %v1343
      %v1345 = vmul.f32 %v1337, %v1344
      %v1347 = vlaneseq
      %v1348 = vshrl.u32 %v1347, 7
      %v1349 = vsub.s32 0, %v1348
      %v1350 = vrot.slane %v1330, %v1349
      %v1352 = vmul.f32 %v1345, %v1350
      %v1354 = vlaneseq
      %v1355 = vshrl.u32 %v1354, 7
      %v1356 = vsub.s32 0, %v1355
      %v1357 = vrot.slane %v1331, %v1356
      %v1359 = vadd.f32 %v1352, %v1357
      %v1360 = vpack.c.bf16 %v1359, %v1359
      %v1361 = vld [vmem:[%s10] sm:$0xf]
      %v1362 = vld [vmem:[%s10 + $0x4] sm:$0xf]
      %v1363 = vld [vmem:[%s10 + $0x8] sm:$0xf]
      %v1364 = vld [vmem:[%s10 + $0xc] sm:$0xf]
      %v1365 = vld [vmem:[%s10 + $0x10] sm:$0xf]
      %v1366 = vld [vmem:[%s10 + $0x14] sm:$0xf]
      %v1367 = vld [vmem:[%s10 + $0x18] sm:$0xf]
      %v1368 = vld [vmem:[%s10 + $0x1c] sm:$0xf]
      %v1369 = vld [vmem:[%s11] sm:$0x1]
      %v1371 = vlaneseq
      %v1372 = vshrl.u32 %v1371, 7
      %v1373 = vsub.s32 0, %v1372
      %v1374 = vrot.slane %v1369, %v1373
      %v1384 = vunpack.c.l.b16 %v1361
      %v1385 = vunpack.c.l.b16 %v1362
      %v1386 = vunpack.c.l.b16 %v1363
      %v1387 = vunpack.c.l.b16 %v1364
      %v1388 = vunpack.c.l.b16 %v1365
      %v1389 = vunpack.c.l.b16 %v1366
      %v1390 = vunpack.c.l.b16 %v1367
      %v1391 = vunpack.c.l.b16 %v1368
      %v1392 = vpack.c.b16 %v1385, %v1384
      %v1393 = vpack.c.b16 %v1387, %v1386
      %v1394 = vpack.c.b16 %v1389, %v1388
      %v1395 = vpack.c.b16 %v1391, %v1390
      %v1401 = vsel %vm594, %v1360, 0
      %1403 = vmatprep.subr.bf16.mxu0 0
      %1404 = vmatpush1.bf16.msra.mxu0 %v1392
      %1405 = vmatprep.subr.bf16.mxu0 0
      %1406 = vmatpush1.bf16.msra.mxu0 %v1393
      %1407 = vmatprep.subr.bf16.mxu0 0
      %1408 = vmatpush1.bf16.msra.mxu0 %v1394
      %1409 = vmatprep.subr.bf16.mxu0 0
      %1410 = vmatpush1.bf16.msra.mxu0 %v1395
      %1411 = vmatprep.subr.bf16.mxu0 0
      %1412 = vmatpush1.bf16.msra.mxu0 0
      %1413 = vmatprep.subr.bf16.mxu0 0
      %1414 = vmatpush1.bf16.msra.mxu0 0
      %1415 = vmatprep.subr.bf16.mxu0 0
      %1416 = vmatpush1.bf16.msra.mxu0 0
      %1417 = vmatprep.subr.bf16.mxu0 0
      %1418 = vmatpush1.bf16.msra.mxu0 0
      %1419 = vmatprep.subr.bf16.mxu0 0
      %1420 = vmatpush1.bf16.msra.mxu0 0
      %1421 = vmatprep.subr.bf16.mxu0 0
      %1422 = vmatpush1.bf16.msra.mxu0 0
      %1423 = vmatprep.subr.bf16.mxu0 0
      %1424 = vmatpush1.bf16.msra.mxu0 0
      %1425 = vmatprep.subr.bf16.mxu0 0
      %1426 = vmatpush1.bf16.msra.mxu0 0
      %1427 = vmatprep.subr.bf16.mxu0 0
      %1428 = vmatpush1.bf16.msra.mxu0 0
      %1429 = vmatprep.subr.bf16.mxu0 0
      %1430 = vmatpush1.bf16.msra.mxu0 0
      %1431 = vmatprep.subr.bf16.mxu0 0
      %1432 = vmatpush1.bf16.msra.mxu0 0
      %1433 = vmatprep.subr.bf16.mxu0 0
      %1434 = vmatpush1.bf16.msra.mxu0 0
      %1435 = vmatprep.mubr.bf16.mxu0 0
      %1436 = vmatmul.mubr.bf16.gmra.mrb[0].mxu0 %v1401
      %v1437 = vpop.f32.mrb[0].mxu0
      %v1438 = vadd.f32 %v1374, %v1437
      %v1439 = vpop.f32.mrb[0].mxu0
      %v1440 = vpop.f32.mrb[0].mxu0
      %v1441 = vpop.f32.mrb[0].mxu0
      %1442 = vdwg.mxu0
      %v1443 = vmul.f32 %v1438, 0.5
      %v1444 = vmul.f32 %v1438, 0.70710677
      %v1445 = verf.f32.pop %v1444
      %v1446 = vadd.f32 %v1445, 1.0
      %v1447 = vmul.f32 %v1443, %v1446
      %v1448 = vpack.c.bf16 %v1447, %v1447
      %v1449 = vld [vmem:[%s12] sm:$0xf]
      %v1450 = vld [vmem:[%s12 + $0x4] sm:$0xf]
      %v1451 = vld [vmem:[%s12 + $0x8] sm:$0xf]
      %v1452 = vld [vmem:[%s12 + $0xc] sm:$0xf]
      %v1453 = vld [vmem:[%s12 + $0x10] sm:$0xf]
      %v1454 = vld [vmem:[%s12 + $0x14] sm:$0xf]
      %v1455 = vld [vmem:[%s12 + $0x18] sm:$0xf]
      %v1456 = vld [vmem:[%s12 + $0x1c] sm:$0xf]
      %v1457 = vld [vmem:[%s12 + $0x20] sm:$0xf]
      %v1458 = vld [vmem:[%s12 + $0x24] sm:$0xf]
      %v1459 = vld [vmem:[%s12 + $0x28] sm:$0xf]
      %v1460 = vld [vmem:[%s12 + $0x2c] sm:$0xf]
      %v1461 = vld [vmem:[%s12 + $0x30] sm:$0xf]
      %v1462 = vld [vmem:[%s12 + $0x34] sm:$0xf]
      %v1463 = vld [vmem:[%s12 + $0x38] sm:$0xf]
      %v1464 = vld [vmem:[%s12 + $0x3c] sm:$0xf]
      %v1465 = vld [vmem:[%s13] sm:$0x1]
      %v1467 = vlaneseq
      %v1468 = vshrl.u32 %v1467, 7
      %v1469 = vsub.s32 0, %v1468
      %v1470 = vrot.slane %v1465, %v1469
      %v1488 = vunpack.c.l.b16 %v1449
      %v1489 = vunpack.c.l.b16 %v1450
      %v1490 = vunpack.c.l.b16 %v1451
      %v1491 = vunpack.c.l.b16 %v1452
      %v1492 = vunpack.c.l.b16 %v1453
      %v1493 = vunpack.c.l.b16 %v1454
      %v1494 = vunpack.c.l.b16 %v1455
      %v1495 = vunpack.c.l.b16 %v1456
      %v1496 = vunpack.c.l.b16 %v1457
      %v1497 = vunpack.c.l.b16 %v1458
      %v1498 = vunpack.c.l.b16 %v1459
      %v1499 = vunpack.c.l.b16 %v1460
      %v1500 = vunpack.c.l.b16 %v1461
      %v1501 = vunpack.c.l.b16 %v1462
      %v1502 = vunpack.c.l.b16 %v1463
      %v1503 = vunpack.c.l.b16 %v1464
      %v1504 = vpack.c.b16 %v1489, %v1488
      %v1505 = vpack.c.b16 %v1491, %v1490
      %v1506 = vpack.c.b16 %v1493, %v1492
      %v1507 = vpack.c.b16 %v1495, %v1494
      %v1508 = vpack.c.b16 %v1497, %v1496
      %v1509 = vpack.c.b16 %v1499, %v1498
      %v1510 = vpack.c.b16 %v1501, %v1500
      %v1511 = vpack.c.b16 %v1503, %v1502
      %1520 = vmatprep.subr.bf16.mxu0 0
      %1521 = vmatpush1.bf16.msra.mxu0 %v1504
      %1522 = vmatprep.subr.bf16.mxu0 0
      %1523 = vmatpush1.bf16.msra.mxu0 %v1505
      %1524 = vmatprep.subr.bf16.mxu0 0
      %1525 = vmatpush1.bf16.msra.mxu0 %v1506
      %1526 = vmatprep.subr.bf16.mxu0 0
      %1527 = vmatpush1.bf16.msra.mxu0 %v1507
      %1528 = vmatprep.subr.bf16.mxu0 0
      %1529 = vmatpush1.bf16.msra.mxu0 %v1508
      %1530 = vmatprep.subr.bf16.mxu0 0
      %1531 = vmatpush1.bf16.msra.mxu0 %v1509
      %1532 = vmatprep.subr.bf16.mxu0 0
      %1533 = vmatpush1.bf16.msra.mxu0 %v1510
      %1534 = vmatprep.subr.bf16.mxu0 0
      %1535 = vmatpush1.bf16.msra.mxu0 %v1511
      %1536 = vmatprep.subr.bf16.mxu0 0
      %1537 = vmatpush1.bf16.msra.mxu0 0
      %1538 = vmatprep.subr.bf16.mxu0 0
      %1539 = vmatpush1.bf16.msra.mxu0 0
      %1540 = vmatprep.subr.bf16.mxu0 0
      %1541 = vmatpush1.bf16.msra.mxu0 0
      %1542 = vmatprep.subr.bf16.mxu0 0
      %1543 = vmatpush1.bf16.msra.mxu0 0
      %1544 = vmatprep.subr.bf16.mxu0 0
      %1545 = vmatpush1.bf16.msra.mxu0 0
      %1546 = vmatprep.subr.bf16.mxu0 0
      %1547 = vmatpush1.bf16.msra.mxu0 0
      %1548 = vmatprep.subr.bf16.mxu0 0
      %1549 = vmatpush1.bf16.msra.mxu0 0
      %1550 = vmatprep.subr.bf16.mxu0 0
      %1551 = vmatpush1.bf16.msra.mxu0 0
      %1552 = vmatprep.mubr.bf16.mxu0 0
      %1553 = vmatmul.mubr.bf16.gmra.mrb[0].mxu0 %v1448
      %v1554 = vpop.f32.mrb[0].mxu0
      %v1555 = vadd.f32 %v1470, %v1554
      %v1556 = vpop.f32.mrb[0].mxu0
      %v1557 = vpop.f32.mrb[0].mxu0
      %v1558 = vpop.f32.mrb[0].mxu0
      %1559 = vdwg.mxu0
      %v1560 = vadd.f32 %v1555, %v1359
      %v1561 = vld [vmem:[%s14] sm:$0x1]
      %v1562 = vld [vmem:[%s15] sm:$0x1]
      %v1563 = vsel %vm594, %v1560, 0.0
      %1564 = vadd.xlane.f32.xlu0 %v1563
      %v1565 = vpop.xlane.xlu0 %1564
      %v1566 = vmul.f32 %v1565, %v1335
      %v1567 = vsub.f32 %v1560, %v1566
      %v1568 = vmul.f32 %v1567, %v1567
      %v1569 = vsel %vm594, %v1568, 0.0
      %1570 = vadd.xlane.f32.xlu0 %v1569
      %v1571 = vpop.xlane.xlu0 %1570
      %v1572 = vmul.f32 %v1571, %v1335
      %v1573 = vadd.f32 %v1572, 1e-05
      %v1574 = vrsqrt.pop %v1573
      %v1575 = vmul.f32 %v1567, %v1574
      %v1577 = vlaneseq
      %v1578 = vshrl.u32 %v1577, 7
      %v1579 = vsub.s32 0, %v1578
      %v1580 = vrot.slane %v1561, %v1579
      %v1582 = vmul.f32 %v1575, %v1580
      %v1584 = vlaneseq
      %v1585 = vshrl.u32 %v1584, 7
      %v1586 = vsub.s32 0, %v1585
      %v1587 = vrot.slane %v1562, %v1586
      %v1589 = vadd.f32 %v1582, %v1587
      %1590 = vst.msk [vmem:[%s530] sm:$0xff] %vm594, %v1589
      %p1591 = scmp.lt.s32.totalorder %s27, 1
      %s1592 = scalar_select %p1591, %s27, 1
      %s1593 = smul.addr %s1592, 8
      %s1594 = scalar_lea.vmem %s16, %s1593
      // Predicated region
      $region85: #{forward_glue.5} parent=83 // pred_check
        %p1595 = pneg %p391
      $region86: #{forward_glue.5} parent=83 // pred_check_branch
        %1597 = sbr.rel (%p1595) target = $region88
      $region87: #{forward_glue.5} parent=83 // pred_region
        _
      $region88: #{forward_glue.5} parent=83 // pred_fallthru
        _
    $region84: #{forward_glue.5} parent=5 // pred_fallthru
      _
    %p1598 = scmp.le.s32.totalorder 2, %s22
    // Predicated region
    $region89: #{forward_glue.5} parent=5 // pred_check
      %p1599 = pneg %p1598
    $region90: #{forward_glue.5} parent=5 // pred_check_branch
      %1601 = sbr.rel (%p1599) target = $region92
    $region91: #{forward_glue.5} parent=5 // pred_region
      %s1602 = ssub.s32 %s22, 2
      // Predicated region
      $region93: #{forward_glue.5} parent=91 // pred_check
        %p1603 = pneg %p397
      $region94: #{forward_glue.5} parent=91 // pred_check_branch
        %1605 = sbr.rel (%p1603) target = $region96
      $region95: #{forward_glue.5} parent=91 // pred_region
        %p1606 = scmp.lt.s32.totalorder %s28, 1
        %s1607 = scalar_select %p1606, %s28, 1
        %s1608 = smul.addr %s1607, 8
        %s1609 = scalar_lea.vmem %s16, %s1608
      $region96: #{forward_glue.5} parent=91 // pred_fallthru
        _
    $region92: #{forward_glue.5} parent=5 // pred_fallthru
      _
  $region6: #{forward_glue.5} parent=0 // loop_footer
    %s26 = sadd.s32 1, %s22
  $region7: #{forward_glue.5} parent=0 // loop_footer_branch
    %21 = sbr.rel target = $region3
  $region8: #{forward_glue.5} parent=0 // loop_exit
    _

</llo_original>
